<compile_context>
chip_gen: v7x
topology: tpu7x:2x2x1
jax: 0.10.0
libtpu: 0.0.40
codegen_flags: <defaults>
</compile_context>

<pallas_src>
import functools
import math

import jax
import jax.numpy as jnp
from jax.experimental import pallas as pl
from jax.experimental.pallas import tpu as pltpu


# ----------------------------- in-kernel helpers --------------------------- #

def _layer_norm(x, gamma, beta, eps=1e-5):
    # x: [S, D] f32, gamma/beta: [1, D] f32
    mean = jnp.mean(x, axis=-1, keepdims=True)
    var = jnp.mean((x - mean) ** 2, axis=-1, keepdims=True)
    return (x - mean) * jax.lax.rsqrt(var + eps) * gamma + beta


def _gelu(x):
    # tanh-approximate GELU, f32 math (EUP tanh)
    c = 0.7978845608028654  # sqrt(2/pi)
    return 0.5 * x * (1.0 + jnp.tanh(c * (x + 0.044715 * x * x * x)))


# ------------------------------ Pallas kernel ------------------------------ #

def multi_dec_kernel(x_ref, mask_ref,
                     wqkv_ref, bqkv_ref, wo_ref, bo_ref,
                     g1_ref, be1_ref, g2_ref, be2_ref,
                     w1_ref, b1_ref, w2_ref, b2_ref,
                     o_ref, xcur_ref, *, num_heads):
    """Grid = (batch, layer).  One fused pre-LN decoder layer per grid step.

    The current activation lives in the f32 VMEM scratch `xcur_ref` across the
    layer axis; it is loaded from HBM only at layer 0 and written back only at
    the last layer.
    """
    layer = pl.program_id(1)

    @pl.when(layer == 0)
    def _():
        xcur_ref[...] = x_ref[...]          # [S, D] (batch dim squeezed)

    x = xcur_ref[...]                       # [S, D] f32
    mask = mask_ref[...]                    # [S, S] f32 additive logit bias
    S, D = x.shape
    H = num_heads
    dh = D // H

    # ---- multi-head self-attention (pre-LN) ----
    h = _layer_norm(x, g1_ref[...], be1_ref[...])
    qkv = jnp.dot(h.astype(jnp.bfloat16), wqkv_ref[...],
                  preferred_element_type=jnp.float32) + bqkv_ref[...]
    q = qkv[:, :D]                          # 1/sqrt(dh) already folded in
    k = qkv[:, D:2 * D]
    v = qkv[:, 2 * D:]

    ctx_heads = []
    # TODO(synk): replace static unroll with lax.fori_loop / head grid axis at
    # production S to bound live ranges (flash-style online softmax).
    for hi in range(H):                     # H small & static
        sl = slice(hi * dh, (hi + 1) * dh)
        q_i = q[:, sl].astype(jnp.bfloat16)     # [S, dh]
        k_i = k[:, sl].astype(jnp.bfloat16)     # [S, dh]
        v_i = v[:, sl].astype(jnp.bfloat16)     # [S, dh]
        # scores = q_i @ k_i.T  (contract last dims; no explicit transpose)
        scores = jax.lax.dot_general(
            q_i, k_i, (((1,), (1,)), ((), ())),
            preferred_element_type=jnp.float32)  # [S, S] f32
        scores = scores + mask
        m = jnp.max(scores, axis=-1, keepdims=True)
        p = jnp.exp(scores - m)
        l = jnp.sum(p, axis=-1, keepdims=True)  # [S, 1]
        # Un-normalized PV matmul first, then scale the small [S, dh] result:
        # saves an [S, S] f32 VPU multiply per head.
        ctx_i = jnp.dot(p.astype(jnp.bfloat16), v_i,
                        preferred_element_type=jnp.float32)       # [S, dh]
        # NOTE: a fully masked row would give l == 0 -> inf; the causal mask
        # always keeps the diagonal, so this cannot happen here.  Guard if
        # padding masks are added later.
        ctx_i = ctx_i * pl.reciprocal(l, approx=True)
        ctx_heads.append(ctx_i.astype(jnp.bfloat16))

    # Single K=D output projection: one concat + one MXU matmul instead of H
    # short-K matmuls accumulated with f32 adds.
    ctx = jnp.concatenate(ctx_heads, axis=-1)                     # [S, D] bf16
    attn_out = jnp.dot(ctx, wo_ref[...],
                       preferred_element_type=jnp.float32) + bo_ref[...]
    x = x + attn_out

    # ---- feed-forward (pre-LN) ----
    h2 = _layer_norm(x, g2_ref[...], be2_ref[...])
    f = jnp.dot(h2.astype(jnp.bfloat16), w1_ref[...],
                preferred_element_type=jnp.float32) + b1_ref[...]
    f = _gelu(f)
    f = jnp.dot(f.astype(jnp.bfloat16), w2_ref[...],
                preferred_element_type=jnp.float32) + b2_ref[...]
    x = x + f

    xcur_ref[...] = x

    # Output residency (P3): o_ref's block index is constant along the layer
    # axis, so HBM writeback happens only when the batch block changes.  This
    # relies on grid=(B, num_layers) with the layer axis innermost/"arbitrary"
    # — do not reorder the grid or change the out_spec index_map.
    @pl.when(layer == pl.num_programs(1) - 1)
    def _():
        o_ref[...] = x.astype(o_ref.dtype)


# ------------------------------- wrapper ----------------------------------- #

def multi_dec_layer(x, mask_bias, params, num_layers, num_heads):
    """Apply the shared decoder layer `num_layers` times (single pallas_call)."""
    B, S, D = x.shape
    assert D % num_heads == 0
    dh = D // num_heads
    scale = 1.0 / math.sqrt(dh)

    # Fold the 1/sqrt(dh) attention scale into the Q projection (one-time
    # weight transform, zero runtime cost) and fuse Q/K/V into one [D, 3D]
    # matmul.  Matmul weights stored in bf16; biases / LN params stay f32.
    wqkv = jnp.concatenate(
        [params['wq'] * scale, params['wk'], params['wv']],
        axis=1).astype(jnp.bfloat16)
    bqkv = jnp.concatenate(
        [params['bq'] * scale, params['bk'], params['bv']], axis=1)

    weights = [
        wqkv, bqkv,
        params['wo'].astype(jnp.bfloat16), params['bo'],
        params['g1'], params['be1'], params['g2'], params['be2'],
        params['w1'].astype(jnp.bfloat16), params['b1'],
        params['w2'].astype(jnp.bfloat16), params['b2'],
    ]

    # Whole-array, single-buffered VMEM residency for the shared weights:
    # their grid index never changes, so pipelined double-buffering only
    # doubles VMEM footprint (matters on v7x's 64 MiB per-core VMEM).
    weight_specs = [pl.BlockSpec(memory_space=pltpu.MemorySpace.VMEM)
                    for _ in weights]

    in_specs = (
        [pl.BlockSpec((pl.Squeezed(), S, D), lambda b, l: (b, 0, 0)),      # x
         # TODO(synk): when mask_bias is known causal, generate it in-kernel
         # with broadcasted_iota instead of streaming [B,1,S,S] from HBM.
         pl.BlockSpec((pl.Squeezed(), pl.Squeezed(), S, S),
                      lambda b, l: (b, 0, 0, 0))]                          # mask
        + weight_specs
    )
    out_spec = pl.BlockSpec((pl.Squeezed(), S, D), lambda b, l: (b, 0, 0))

    # VMEM budget from actual buffer sizes (x/mask/out double-buffered blocks,
    # weights single-buffered, activation scratch) + margin; capped well below
    # v7x's 64 MiB physical per-core VMEM.  Raise toward 128 MiB on v5e/v6e if
    # larger S tiles are wanted.
    weight_bytes = sum(int(w.size) * jnp.dtype(w.dtype).itemsize
                       for w in weights)
    block_bytes = (2 * (S * D * 4)        # x blocks (double-buffered)
                   + 2 * (S * S * 4)      # mask blocks
                   + 2 * (S * D * 4)      # out blocks
                   + S * D * 4)           # activation scratch
    vmem_limit = int(min(48 * 1024 * 1024,
                         max(2 * (weight_bytes + block_bytes) + (4 << 20),
                             16 << 20)))

    kernel = functools.partial(multi_dec_kernel, num_heads=num_heads)
    return pl.pallas_call(
        kernel,
        out_shape=jax.ShapeDtypeStruct((B, S, D), jnp.float32),
        grid_spec=pltpu.PrefetchScalarGridSpec(
            num_scalar_prefetch=0,
            grid=(B, num_layers),           # layer axis innermost ("arbitrary")
            in_specs=in_specs,
            out_specs=out_spec,
            scratch_shapes=[pltpu.VMEM((S, D), jnp.float32)],
        ),
        compiler_params=pltpu.CompilerParams(
            dimension_semantics=("parallel", "arbitrary"),
            vmem_limit_bytes=vmem_limit),
    )(x, mask_bias, *weights)


# ----------------------------- pure-JAX reference --------------------------- #

def _ref_layer(x, mask_bias, p, num_heads):
    B, S, D = x.shape
    H = num_heads
    dh = D // H

    def ln(z, g, b, eps=1e-5):
        mu = jnp.mean(z, axis=-1, keepdims=True)
        va = jnp.mean((z - mu) ** 2, axis=-1, keepdims=True)
        return (z - mu) * jax.lax.rsqrt(va + eps) * g + b

    h = ln(x, p['g1'], p['be1'])
    q = h @ p['wq'] + p['bq']
    k = h @ p['wk'] + p['bk']
    v = h @ p['wv'] + p['bv']
    qh = q.reshape(B, S, H, dh).transpose(0, 2, 1, 3)
    kh = k.reshape(B, S, H, dh).transpose(0, 2, 1, 3)
    vh = v.reshape(B, S, H, dh).transpose(0, 2, 1, 3)
    scores = jnp.einsum('bhqd,bhkd->bhqk', qh, kh) / (dh ** 0.5) + mask_bias
    attn = jax.nn.softmax(scores, axis=-1)
    ctx = jnp.einsum('bhqk,bhkd->bhqd', attn, vh).transpose(0, 2, 1, 3).reshape(B, S, D)
    x = x + ctx @ p['wo'] + p['bo']

    h2 = ln(x, p['g2'], p['be2'])
    c = 0.7978845608028654
    f = h2 @ p['w1'] + p['b1']
    f = 0.5 * f * (1.0 + jnp.tanh(c * (f + 0.044715 * f ** 3)))
    return x + f @ p['w2'] + p['b2']


def _ref_multi(x, mask_bias, p, num_layers, num_heads):
    for _ in range(num_layers):
        x = _ref_layer(x, mask_bias, p, num_heads)
    return x


# --------------------------------- main ------------------------------------ #

def make_params(key, D, F):
    ks = jax.random.split(key, 8)
    s_d = 1.0 / (D ** 0.5)
    s_f = 1.0 / (F ** 0.5)
    p = {
        'wq': jax.random.normal(ks[0], (D, D), jnp.float32) * s_d,
        'wk': jax.random.normal(ks[1], (D, D), jnp.float32) * s_d,
        'wv': jax.random.normal(ks[2], (D, D), jnp.float32) * s_d,
        'wo': jax.random.normal(ks[3], (D, D), jnp.float32) * s_d,
        'bq': jnp.zeros((1, D), jnp.float32),
        'bk': jnp.zeros((1, D), jnp.float32),
        'bv': jnp.zeros((1, D), jnp.float32),
        'bo': jnp.zeros((1, D), jnp.float32),
        'g1': jnp.ones((1, D), jnp.float32) + 0.1 * jax.random.normal(ks[4], (1, D), jnp.float32),
        'be1': 0.01 * jax.random.normal(ks[5], (1, D), jnp.float32),
        'g2': jnp.ones((1, D), jnp.float32) + 0.1 * jax.random.normal(ks[6], (1, D), jnp.float32),
        'be2': 0.01 * jax.random.normal(ks[7], (1, D), jnp.float32),
        'w1': jax.random.normal(jax.random.fold_in(key, 100), (D, F), jnp.float32) * s_d,
        'b1': jnp.zeros((1, F), jnp.float32),
        'w2': jax.random.normal(jax.random.fold_in(key, 101), (F, D), jnp.float32) * s_f,
        'b2': jnp.zeros((1, D), jnp.float32),
    }
    return p


if __name__ == "__main__":
    B, S, D, H, F = 2, 8, 32, 4, 64
    NUM_LAYERS = 2

    key = jax.random.PRNGKey(0)
    kx, kp = jax.random.split(key)

    x = jax.random.normal(kx, (B, S, D), jnp.float32)
    # causal additive mask bias, broadcast over heads: [B, 1, S, S]
    causal = jnp.tril(jnp.ones((S, S), jnp.float32))
    mask_bias = jnp.where(causal > 0, 0.0, -1e9).astype(jnp.float32)
    mask_bias = jnp.broadcast_to(mask_bias[None, None], (B, 1, S, S))

    params = make_params(kp, D, F)

    out = multi_dec_layer(x, mask_bias, params, NUM_LAYERS, H)
    out = jax.block_until_ready(out)

    ref = jax.block_until_ready(_ref_multi(x, mask_bias, params, NUM_LAYERS, H))
    assert out.shape == (B, S, D)
    # bf16 matmul operands (+ approx reciprocal) applied num_layers times vs.
    # the pure-f32 reference -> validate at production shapes before tightening.
    assert jnp.allclose(out, ref, atol=5e-2, rtol=5e-2), (
        float(jnp.max(jnp.abs(out - ref))))

    print("KERNEL_OK")
</pallas_src>

<mosaic_0001>
module attributes {stable_mosaic.version = 11 : i64} {
  func.func @multi_dec_kernel(%arg0: i32, %arg1: i32, %arg2: memref<1x8x32xf32, #tpu.memory_space<vmem>>, %arg3: memref<1x1x8x8xf32, #tpu.memory_space<vmem>>, %arg4: memref<32x96xbf16, #tpu.memory_space<vmem>>, %arg5: memref<1x96xf32, #tpu.memory_space<vmem>>, %arg6: memref<32x32xbf16, #tpu.memory_space<vmem>>, %arg7: memref<1x32xf32, #tpu.memory_space<vmem>>, %arg8: memref<1x32xf32, #tpu.memory_space<vmem>>, %arg9: memref<1x32xf32, #tpu.memory_space<vmem>>, %arg10: memref<1x32xf32, #tpu.memory_space<vmem>>, %arg11: memref<1x32xf32, #tpu.memory_space<vmem>>, %arg12: memref<32x64xbf16, #tpu.memory_space<vmem>>, %arg13: memref<1x64xf32, #tpu.memory_space<vmem>>, %arg14: memref<64x32xbf16, #tpu.memory_space<vmem>>, %arg15: memref<1x32xf32, #tpu.memory_space<vmem>>, %arg16: memref<1x8x32xf32, #tpu.memory_space<vmem>>, %arg17: memref<8x32xf32, #tpu.memory_space<vmem>>) attributes {dimension_semantics = [#tpu.dimension_semantics<parallel>, #tpu.dimension_semantics<arbitrary>], iteration_bounds = array<i64: 2, 2>, scalar_prefetch = 0 : i64, scratch_operands = 1 : i64, tpu.core_type = #tpu.core_type<tc>, window_params = [{transform_indices = @transform_0, window_bounds = array<i64: 1, 8, 32>}, {transform_indices = @transform_1, window_bounds = array<i64: 1, 1, 8, 8>}, {pipeline_mode = #tpu.pipeline_mode<synchronous>, transform_indices = @transform_2, window_bounds = array<i64: 32, 96>}, {pipeline_mode = #tpu.pipeline_mode<synchronous>, transform_indices = @transform_3, window_bounds = array<i64: 1, 96>}, {pipeline_mode = #tpu.pipeline_mode<synchronous>, transform_indices = @transform_4, window_bounds = array<i64: 32, 32>}, {pipeline_mode = #tpu.pipeline_mode<synchronous>, transform_indices = @transform_5, window_bounds = array<i64: 1, 32>}, {pipeline_mode = #tpu.pipeline_mode<synchronous>, transform_indices = @transform_6, window_bounds = array<i64: 1, 32>}, {pipeline_mode = #tpu.pipeline_mode<synchronous>, transform_indices = @transform_7, window_bounds = array<i64: 1, 32>}, {pipeline_mode = #tpu.pipeline_mode<synchronous>, transform_indices = @transform_8, window_bounds = array<i64: 1, 32>}, {pipeline_mode = #tpu.pipeline_mode<synchronous>, transform_indices = @transform_9, window_bounds = array<i64: 1, 32>}, {pipeline_mode = #tpu.pipeline_mode<synchronous>, transform_indices = @transform_10, window_bounds = array<i64: 32, 64>}, {pipeline_mode = #tpu.pipeline_mode<synchronous>, transform_indices = @transform_11, window_bounds = array<i64: 1, 64>}, {pipeline_mode = #tpu.pipeline_mode<synchronous>, transform_indices = @transform_12, window_bounds = array<i64: 64, 32>}, {pipeline_mode = #tpu.pipeline_mode<synchronous>, transform_indices = @transform_13, window_bounds = array<i64: 1, 32>}, {transform_indices = @transform_14, window_bounds = array<i64: 1, 8, 32>}]} {
    %c0_i32 = arith.constant 0 : i32
    %0 = arith.cmpi eq, %arg1, %c0_i32 : i32
    %1 = arith.extui %0 : i1 to i32
    %c0_i32_0 = arith.constant 0 : i32
    %2 = arith.cmpi ne, %1, %c0_i32_0 : i32
    scf.if %2 {
      %c0_66 = arith.constant 0 : index
      %c0_67 = arith.constant 0 : index
      %c0_68 = arith.constant 0 : index
      %184 = vector.load %arg2[%c0_66, %c0_67, %c0_68] : memref<1x8x32xf32, #tpu.memory_space<vmem>>, vector<1x8x32xf32>
      %185 = vector.shape_cast %184 : vector<1x8x32xf32> to vector<8x32xf32>
      %c0_69 = arith.constant 0 : index
      %c0_70 = arith.constant 0 : index
      %186 = vector.load %arg17[%c0_69, %c0_70] : memref<8x32xf32, #tpu.memory_space<vmem>>, vector<8x32xf32>
      tpu.vector_store %arg17[%c0_69, %c0_70], %185 {strides = array<i32>} : memref<8x32xf32, #tpu.memory_space<vmem>>, vector<8x32xf32>,
    } else {
    }
    %c0 = arith.constant 0 : index
    %c0_1 = arith.constant 0 : index
    %3 = vector.load %arg17[%c0, %c0_1] : memref<8x32xf32, #tpu.memory_space<vmem>>, vector<8x32xf32>
    %c0_2 = arith.constant 0 : index
    %c0_3 = arith.constant 0 : index
    %c0_4 = arith.constant 0 : index
    %c0_5 = arith.constant 0 : index
    %4 = vector.load %arg3[%c0_2, %c0_3, %c0_4, %c0_5] : memref<1x1x8x8xf32, #tpu.memory_space<vmem>>, vector<1x1x8x8xf32>
    %5 = vector.shape_cast %4 : vector<1x1x8x8xf32> to vector<8x8xf32>
    %c0_6 = arith.constant 0 : index
    %c0_7 = arith.constant 0 : index
    %6 = vector.load %arg8[%c0_6, %c0_7] : memref<1x32xf32, #tpu.memory_space<vmem>>, vector<1x32xf32>
    %c0_8 = arith.constant 0 : index
    %c0_9 = arith.constant 0 : index
    %7 = vector.load %arg9[%c0_8, %c0_9] : memref<1x32xf32, #tpu.memory_space<vmem>>, vector<1x32xf32>
    %cst = arith.constant dense<0.000000e+00> : vector<8xf32>
    %8 = vector.multi_reduction <add>, %3, %cst [1] : vector<8x32xf32> to vector<8xf32>
    %9 = vector.shape_cast %8 : vector<8xf32> to vector<8x1xf32>
    %cst_10 = arith.constant 3.200000e+01 : f32
    %10 = vector.broadcast %cst_10 : f32 to vector<8x1xf32>
    %11 = arith.divf %9, %10 : vector<8x1xf32>
    %12 = vector.broadcast %11 : vector<8x1xf32> to vector<8x32xf32>
    %13 = arith.subf %3, %12 : vector<8x32xf32>
    %14 = arith.mulf %13, %13 : vector<8x32xf32>
    %cst_11 = arith.constant dense<0.000000e+00> : vector<8xf32>
    %15 = vector.multi_reduction <add>, %14, %cst_11 [1] : vector<8x32xf32> to vector<8xf32>
    %16 = vector.shape_cast %15 : vector<8xf32> to vector<8x1xf32>
    %cst_12 = arith.constant 3.200000e+01 : f32
    %17 = vector.broadcast %cst_12 : f32 to vector<8x1xf32>
    %18 = arith.divf %16, %17 : vector<8x1xf32>
    %19 = vector.broadcast %11 : vector<8x1xf32> to vector<8x32xf32>
    %20 = arith.subf %3, %19 : vector<8x32xf32>
    %cst_13 = arith.constant 9.99999974E-6 : f32
    %21 = vector.broadcast %cst_13 : f32 to vector<8x1xf32>
    %22 = arith.addf %18, %21 : vector<8x1xf32>
    %23 = math.rsqrt %22 : vector<8x1xf32>
    %24 = vector.broadcast %23 : vector<8x1xf32> to vector<8x32xf32>
    %25 = arith.mulf %20, %24 : vector<8x32xf32>
    %26 = vector.broadcast %6 : vector<1x32xf32> to vector<8x32xf32>
    %27 = arith.mulf %25, %26 : vector<8x32xf32>
    %28 = vector.broadcast %7 : vector<1x32xf32> to vector<8x32xf32>
    %29 = arith.addf %27, %28 : vector<8x32xf32>
    %30 = arith.truncf %29 : vector<8x32xf32> to vector<8x32xbf16>
    %c0_14 = arith.constant 0 : index
    %c0_15 = arith.constant 0 : index
    %31 = vector.load %arg4[%c0_14, %c0_15] : memref<32x96xbf16, #tpu.memory_space<vmem>>, vector<32x96xbf16>
    %cst_16 = arith.constant dense<0.000000e+00> : vector<8x96xf32>
    %32 = tpu.matmul %30, %31, %cst_16 {dimension_numbers = #tpu.dot_dimension_numbers<[1], [0], [0], [1], [0, 0, 1, 1], [], []>} : vector<8x32xbf16>, vector<32x96xbf16>, vector<8x96xf32> -> vector<8x96xf32>
    %c0_17 = arith.constant 0 : index
    %c0_18 = arith.constant 0 : index
    %33 = vector.load %arg5[%c0_17, %c0_18] : memref<1x96xf32, #tpu.memory_space<vmem>>, vector<1x96xf32>
    %34 = vector.broadcast %33 : vector<1x96xf32> to vector<8x96xf32>
    %35 = arith.addf %32, %34 : vector<8x96xf32>
    %36 = vector.extract_strided_slice %35 {offsets = [0, 0], sizes = [8, 32], strides = [1, 1]} : vector<8x96xf32> to vector<8x32xf32>
    %37 = vector.extract_strided_slice %35 {offsets = [0, 32], sizes = [8, 32], strides = [1, 1]} : vector<8x96xf32> to vector<8x32xf32>
    %38 = vector.extract_strided_slice %35 {offsets = [0, 64], sizes = [8, 32], strides = [1, 1]} : vector<8x96xf32> to vector<8x32xf32>
    %39 = vector.extract_strided_slice %36 {offsets = [0, 0], sizes = [8, 8], strides = [1, 1]} : vector<8x32xf32> to vector<8x8xf32>
    %40 = arith.truncf %39 : vector<8x8xf32> to vector<8x8xbf16>
    %41 = vector.extract_strided_slice %37 {offsets = [0, 0], sizes = [8, 8], strides = [1, 1]} : vector<8x32xf32> to vector<8x8xf32>
    %42 = arith.truncf %41 : vector<8x8xf32> to vector<8x8xbf16>
    %43 = vector.extract_strided_slice %38 {offsets = [0, 0], sizes = [8, 8], strides = [1, 1]} : vector<8x32xf32> to vector<8x8xf32>
    %44 = arith.truncf %43 : vector<8x8xf32> to vector<8x8xbf16>
    %cst_19 = arith.constant dense<0.000000e+00> : vector<8x8xf32>
    %45 = tpu.matmul %40, %42, %cst_19 {dimension_numbers = #tpu.dot_dimension_numbers<[1], [1], [0], [0], [0, 0, 1, 0], [], []>} : vector<8x8xbf16>, vector<8x8xbf16>, vector<8x8xf32> -> vector<8x8xf32>
    %46 = arith.addf %45, %5 : vector<8x8xf32>
    %cst_20 = arith.constant dense<0xFF800000> : vector<8xf32>
    %47 = vector.multi_reduction <maximumf>, %46, %cst_20 [1] : vector<8x8xf32> to vector<8xf32>
    %48 = vector.shape_cast %47 : vector<8xf32> to vector<8x1xf32>
    %49 = vector.broadcast %48 : vector<8x1xf32> to vector<8x8xf32>
    %50 = arith.subf %46, %49 : vector<8x8xf32>
    %51 = math.exp %50 : vector<8x8xf32>
    %cst_21 = arith.constant dense<0.000000e+00> : vector<8xf32>
    %52 = vector.multi_reduction <add>, %51, %cst_21 [1] : vector<8x8xf32> to vector<8xf32>
    %53 = vector.shape_cast %52 : vector<8xf32> to vector<8x1xf32>
    %54 = arith.truncf %51 : vector<8x8xf32> to vector<8x8xbf16>
    %cst_22 = arith.constant dense<0.000000e+00> : vector<8x8xf32>
    %55 = tpu.matmul %54, %44, %cst_22 {dimension_numbers = #tpu.dot_dimension_numbers<[1], [0], [0], [1], [0, 0, 1, 1], [], []>} : vector<8x8xbf16>, vector<8x8xbf16>, vector<8x8xf32> -> vector<8x8xf32>
    %56 = tpu.reciprocal %53 {approx = true} : vector<8x1xf32> -> vector<8x1xf32>
    %57 = vector.broadcast %56 : vector<8x1xf32> to vector<8x8xf32>
    %58 = arith.mulf %55, %57 : vector<8x8xf32>
    %59 = arith.truncf %58 : vector<8x8xf32> to vector<8x8xbf16>
    %60 = vector.extract_strided_slice %36 {offsets = [0, 8], sizes = [8, 8], strides = [1, 1]} : vector<8x32xf32> to vector<8x8xf32>
    %61 = arith.truncf %60 : vector<8x8xf32> to vector<8x8xbf16>
    %62 = vector.extract_strided_slice %37 {offsets = [0, 8], sizes = [8, 8], strides = [1, 1]} : vector<8x32xf32> to vector<8x8xf32>
    %63 = arith.truncf %62 : vector<8x8xf32> to vector<8x8xbf16>
    %64 = vector.extract_strided_slice %38 {offsets = [0, 8], sizes = [8, 8], strides = [1, 1]} : vector<8x32xf32> to vector<8x8xf32>
    %65 = arith.truncf %64 : vector<8x8xf32> to vector<8x8xbf16>
    %cst_23 = arith.constant dense<0.000000e+00> : vector<8x8xf32>
    %66 = tpu.matmul %61, %63, %cst_23 {dimension_numbers = #tpu.dot_dimension_numbers<[1], [1], [0], [0], [0, 0, 1, 0], [], []>} : vector<8x8xbf16>, vector<8x8xbf16>, vector<8x8xf32> -> vector<8x8xf32>
    %67 = arith.addf %66, %5 : vector<8x8xf32>
    %cst_24 = arith.constant dense<0xFF800000> : vector<8xf32>
    %68 = vector.multi_reduction <maximumf>, %67, %cst_24 [1] : vector<8x8xf32> to vector<8xf32>
    %69 = vector.shape_cast %68 : vector<8xf32> to vector<8x1xf32>
    %70 = vector.broadcast %69 : vector<8x1xf32> to vector<8x8xf32>
    %71 = arith.subf %67, %70 : vector<8x8xf32>
    %72 = math.exp %71 : vector<8x8xf32>
    %cst_25 = arith.constant dense<0.000000e+00> : vector<8xf32>
    %73 = vector.multi_reduction <add>, %72, %cst_25 [1] : vector<8x8xf32> to vector<8xf32>
    %74 = vector.shape_cast %73 : vector<8xf32> to vector<8x1xf32>
    %75 = arith.truncf %72 : vector<8x8xf32> to vector<8x8xbf16>
    %cst_26 = arith.constant dense<0.000000e+00> : vector<8x8xf32>
    %76 = tpu.matmul %75, %65, %cst_26 {dimension_numbers = #tpu.dot_dimension_numbers<[1], [0], [0], [1], [0, 0, 1, 1], [], []>} : vector<8x8xbf16>, vector<8x8xbf16>, vector<8x8xf32> -> vector<8x8xf32>
    %77 = tpu.reciprocal %74 {approx = true} : vector<8x1xf32> -> vector<8x1xf32>
    %78 = vector.broadcast %77 : vector<8x1xf32> to vector<8x8xf32>
    %79 = arith.mulf %76, %78 : vector<8x8xf32>
    %80 = arith.truncf %79 : vector<8x8xf32> to vector<8x8xbf16>
    %81 = vector.extract_strided_slice %36 {offsets = [0, 16], sizes = [8, 8], strides = [1, 1]} : vector<8x32xf32> to vector<8x8xf32>
    %82 = arith.truncf %81 : vector<8x8xf32> to vector<8x8xbf16>
    %83 = vector.extract_strided_slice %37 {offsets = [0, 16], sizes = [8, 8], strides = [1, 1]} : vector<8x32xf32> to vector<8x8xf32>
    %84 = arith.truncf %83 : vector<8x8xf32> to vector<8x8xbf16>
    %85 = vector.extract_strided_slice %38 {offsets = [0, 16], sizes = [8, 8], strides = [1, 1]} : vector<8x32xf32> to vector<8x8xf32>
    %86 = arith.truncf %85 : vector<8x8xf32> to vector<8x8xbf16>
    %cst_27 = arith.constant dense<0.000000e+00> : vector<8x8xf32>
    %87 = tpu.matmul %82, %84, %cst_27 {dimension_numbers = #tpu.dot_dimension_numbers<[1], [1], [0], [0], [0, 0, 1, 0], [], []>} : vector<8x8xbf16>, vector<8x8xbf16>, vector<8x8xf32> -> vector<8x8xf32>
    %88 = arith.addf %87, %5 : vector<8x8xf32>
    %cst_28 = arith.constant dense<0xFF800000> : vector<8xf32>
    %89 = vector.multi_reduction <maximumf>, %88, %cst_28 [1] : vector<8x8xf32> to vector<8xf32>
    %90 = vector.shape_cast %89 : vector<8xf32> to vector<8x1xf32>
    %91 = vector.broadcast %90 : vector<8x1xf32> to vector<8x8xf32>
    %92 = arith.subf %88, %91 : vector<8x8xf32>
    %93 = math.exp %92 : vector<8x8xf32>
    %cst_29 = arith.constant dense<0.000000e+00> : vector<8xf32>
    %94 = vector.multi_reduction <add>, %93, %cst_29 [1] : vector<8x8xf32> to vector<8xf32>
    %95 = vector.shape_cast %94 : vector<8xf32> to vector<8x1xf32>
    %96 = arith.truncf %93 : vector<8x8xf32> to vector<8x8xbf16>
    %cst_30 = arith.constant dense<0.000000e+00> : vector<8x8xf32>
    %97 = tpu.matmul %96, %86, %cst_30 {dimension_numbers = #tpu.dot_dimension_numbers<[1], [0], [0], [1], [0, 0, 1, 1], [], []>} : vector<8x8xbf16>, vector<8x8xbf16>, vector<8x8xf32> -> vector<8x8xf32>
    %98 = tpu.reciprocal %95 {approx = true} : vector<8x1xf32> -> vector<8x1xf32>
    %99 = vector.broadcast %98 : vector<8x1xf32> to vector<8x8xf32>
    %100 = arith.mulf %97, %99 : vector<8x8xf32>
    %101 = arith.truncf %100 : vector<8x8xf32> to vector<8x8xbf16>
    %102 = vector.extract_strided_slice %36 {offsets = [0, 24], sizes = [8, 8], strides = [1, 1]} : vector<8x32xf32> to vector<8x8xf32>
    %103 = arith.truncf %102 : vector<8x8xf32> to vector<8x8xbf16>
    %104 = vector.extract_strided_slice %37 {offsets = [0, 24], sizes = [8, 8], strides = [1, 1]} : vector<8x32xf32> to vector<8x8xf32>
    %105 = arith.truncf %104 : vector<8x8xf32> to vector<8x8xbf16>
    %106 = vector.extract_strided_slice %38 {offsets = [0, 24], sizes = [8, 8], strides = [1, 1]} : vector<8x32xf32> to vector<8x8xf32>
    %107 = arith.truncf %106 : vector<8x8xf32> to vector<8x8xbf16>
    %cst_31 = arith.constant dense<0.000000e+00> : vector<8x8xf32>
    %108 = tpu.matmul %103, %105, %cst_31 {dimension_numbers = #tpu.dot_dimension_numbers<[1], [1], [0], [0], [0, 0, 1, 0], [], []>} : vector<8x8xbf16>, vector<8x8xbf16>, vector<8x8xf32> -> vector<8x8xf32>
    %109 = arith.addf %108, %5 : vector<8x8xf32>
    %cst_32 = arith.constant dense<0xFF800000> : vector<8xf32>
    %110 = vector.multi_reduction <maximumf>, %109, %cst_32 [1] : vector<8x8xf32> to vector<8xf32>
    %111 = vector.shape_cast %110 : vector<8xf32> to vector<8x1xf32>
    %112 = vector.broadcast %111 : vector<8x1xf32> to vector<8x8xf32>
    %113 = arith.subf %109, %112 : vector<8x8xf32>
    %114 = math.exp %113 : vector<8x8xf32>
    %cst_33 = arith.constant dense<0.000000e+00> : vector<8xf32>
    %115 = vector.multi_reduction <add>, %114, %cst_33 [1] : vector<8x8xf32> to vector<8xf32>
    %116 = vector.shape_cast %115 : vector<8xf32> to vector<8x1xf32>
    %117 = arith.truncf %114 : vector<8x8xf32> to vector<8x8xbf16>
    %cst_34 = arith.constant dense<0.000000e+00> : vector<8x8xf32>
    %118 = tpu.matmul %117, %107, %cst_34 {dimension_numbers = #tpu.dot_dimension_numbers<[1], [0], [0], [1], [0, 0, 1, 1], [], []>} : vector<8x8xbf16>, vector<8x8xbf16>, vector<8x8xf32> -> vector<8x8xf32>
    %119 = tpu.reciprocal %116 {approx = true} : vector<8x1xf32> -> vector<8x1xf32>
    %120 = vector.broadcast %119 : vector<8x1xf32> to vector<8x8xf32>
    %121 = arith.mulf %118, %120 : vector<8x8xf32>
    %122 = arith.truncf %121 : vector<8x8xf32> to vector<8x8xbf16>
    %123 = tpu.concatenate %59, %80, %101, %122 in 1 : vector<8x8xbf16>, vector<8x8xbf16>, vector<8x8xbf16>, vector<8x8xbf16> -> vector<8x32xbf16>
    %c0_35 = arith.constant 0 : index
    %c0_36 = arith.constant 0 : index
    %124 = vector.load %arg6[%c0_35, %c0_36] : memref<32x32xbf16, #tpu.memory_space<vmem>>, vector<32x32xbf16>
    %cst_37 = arith.constant dense<0.000000e+00> : vector<8x32xf32>
    %125 = tpu.matmul %123, %124, %cst_37 {dimension_numbers = #tpu.dot_dimension_numbers<[1], [0], [0], [1], [0, 0, 1, 1], [], []>} : vector<8x32xbf16>, vector<32x32xbf16>, vector<8x32xf32> -> vector<8x32xf32>
    %c0_38 = arith.constant 0 : index
    %c0_39 = arith.constant 0 : index
    %126 = vector.load %arg7[%c0_38, %c0_39] : memref<1x32xf32, #tpu.memory_space<vmem>>, vector<1x32xf32>
    %127 = vector.broadcast %126 : vector<1x32xf32> to vector<8x32xf32>
    %128 = arith.addf %125, %127 : vector<8x32xf32>
    %129 = arith.addf %3, %128 : vector<8x32xf32>
    %c0_40 = arith.constant 0 : index
    %c0_41 = arith.constant 0 : index
    %130 = vector.load %arg10[%c0_40, %c0_41] : memref<1x32xf32, #tpu.memory_space<vmem>>, vector<1x32xf32>
    %c0_42 = arith.constant 0 : index
    %c0_43 = arith.constant 0 : index
    %131 = vector.load %arg11[%c0_42, %c0_43] : memref<1x32xf32, #tpu.memory_space<vmem>>, vector<1x32xf32>
    %cst_44 = arith.constant dense<0.000000e+00> : vector<8xf32>
    %132 = vector.multi_reduction <add>, %129, %cst_44 [1] : vector<8x32xf32> to vector<8xf32>
    %133 = vector.shape_cast %132 : vector<8xf32> to vector<8x1xf32>
    %cst_45 = arith.constant 3.200000e+01 : f32
    %134 = vector.broadcast %cst_45 : f32 to vector<8x1xf32>
    %135 = arith.divf %133, %134 : vector<8x1xf32>
    %136 = vector.broadcast %135 : vector<8x1xf32> to vector<8x32xf32>
    %137 = arith.subf %129, %136 : vector<8x32xf32>
    %138 = arith.mulf %137, %137 : vector<8x32xf32>
    %cst_46 = arith.constant dense<0.000000e+00> : vector<8xf32>
    %139 = vector.multi_reduction <add>, %138, %cst_46 [1] : vector<8x32xf32> to vector<8xf32>
    %140 = vector.shape_cast %139 : vector<8xf32> to vector<8x1xf32>
    %cst_47 = arith.constant 3.200000e+01 : f32
    %141 = vector.broadcast %cst_47 : f32 to vector<8x1xf32>
    %142 = arith.divf %140, %141 : vector<8x1xf32>
    %143 = vector.broadcast %135 : vector<8x1xf32> to vector<8x32xf32>
    %144 = arith.subf %129, %143 : vector<8x32xf32>
    %cst_48 = arith.constant 9.99999974E-6 : f32
    %145 = vector.broadcast %cst_48 : f32 to vector<8x1xf32>
    %146 = arith.addf %142, %145 : vector<8x1xf32>
    %147 = math.rsqrt %146 : vector<8x1xf32>
    %148 = vector.broadcast %147 : vector<8x1xf32> to vector<8x32xf32>
    %149 = arith.mulf %144, %148 : vector<8x32xf32>
    %150 = vector.broadcast %130 : vector<1x32xf32> to vector<8x32xf32>
    %151 = arith.mulf %149, %150 : vector<8x32xf32>
    %152 = vector.broadcast %131 : vector<1x32xf32> to vector<8x32xf32>
    %153 = arith.addf %151, %152 : vector<8x32xf32>
    %154 = arith.truncf %153 : vector<8x32xf32> to vector<8x32xbf16>
    %c0_49 = arith.constant 0 : index
    %c0_50 = arith.constant 0 : index
    %155 = vector.load %arg12[%c0_49, %c0_50] : memref<32x64xbf16, #tpu.memory_space<vmem>>, vector<32x64xbf16>
    %cst_51 = arith.constant dense<0.000000e+00> : vector<8x64xf32>
    %156 = tpu.matmul %154, %155, %cst_51 {dimension_numbers = #tpu.dot_dimension_numbers<[1], [0], [0], [1], [0, 0, 1, 1], [], []>} : vector<8x32xbf16>, vector<32x64xbf16>, vector<8x64xf32> -> vector<8x64xf32>
    %c0_52 = arith.constant 0 : index
    %c0_53 = arith.constant 0 : index
    %157 = vector.load %arg13[%c0_52, %c0_53] : memref<1x64xf32, #tpu.memory_space<vmem>>, vector<1x64xf32>
    %158 = vector.broadcast %157 : vector<1x64xf32> to vector<8x64xf32>
    %159 = arith.addf %156, %158 : vector<8x64xf32>
    %cst_54 = arith.constant 5.000000e-01 : f32
    %160 = vector.broadcast %cst_54 : f32 to vector<8x64xf32>
    %161 = arith.mulf %160, %159 : vector<8x64xf32>
    %cst_55 = arith.constant 4.471500e-02 : f32
    %162 = vector.broadcast %cst_55 : f32 to vector<8x64xf32>
    %163 = arith.mulf %162, %159 : vector<8x64xf32>
    %164 = arith.mulf %163, %159 : vector<8x64xf32>
    %165 = arith.mulf %164, %159 : vector<8x64xf32>
    %166 = arith.addf %159, %165 : vector<8x64xf32>
    %cst_56 = arith.constant 0.797884583 : f32
    %167 = vector.broadcast %cst_56 : f32 to vector<8x64xf32>
    %168 = arith.mulf %167, %166 : vector<8x64xf32>
    %169 = math.tanh %168 : vector<8x64xf32>
    %cst_57 = arith.constant 1.000000e+00 : f32
    %170 = vector.broadcast %cst_57 : f32 to vector<8x64xf32>
    %171 = arith.addf %170, %169 : vector<8x64xf32>
    %172 = arith.mulf %161, %171 : vector<8x64xf32>
    %173 = arith.truncf %172 : vector<8x64xf32> to vector<8x64xbf16>
    %c0_58 = arith.constant 0 : index
    %c0_59 = arith.constant 0 : index
    %174 = vector.load %arg14[%c0_58, %c0_59] : memref<64x32xbf16, #tpu.memory_space<vmem>>, vector<64x32xbf16>
    %cst_60 = arith.constant dense<0.000000e+00> : vector<8x32xf32>
    %175 = tpu.matmul %173, %174, %cst_60 {dimension_numbers = #tpu.dot_dimension_numbers<[1], [0], [0], [1], [0, 0, 1, 1], [], []>} : vector<8x64xbf16>, vector<64x32xbf16>, vector<8x32xf32> -> vector<8x32xf32>
    %c0_61 = arith.constant 0 : index
    %c0_62 = arith.constant 0 : index
    %176 = vector.load %arg15[%c0_61, %c0_62] : memref<1x32xf32, #tpu.memory_space<vmem>>, vector<1x32xf32>
    %177 = vector.broadcast %176 : vector<1x32xf32> to vector<8x32xf32>
    %178 = arith.addf %175, %177 : vector<8x32xf32>
    %179 = arith.addf %129, %178 : vector<8x32xf32>
    %c0_63 = arith.constant 0 : index
    %c0_64 = arith.constant 0 : index
    %180 = vector.load %arg17[%c0_63, %c0_64] : memref<8x32xf32, #tpu.memory_space<vmem>>, vector<8x32xf32>
    tpu.vector_store %arg17[%c0_63, %c0_64], %179 {strides = array<i32>} : memref<8x32xf32, #tpu.memory_space<vmem>>, vector<8x32xf32>,
    %c1_i32 = arith.constant 1 : i32
    %181 = arith.cmpi eq, %arg1, %c1_i32 : i32
    %182 = arith.extui %181 : i1 to i32
    %c0_i32_65 = arith.constant 0 : i32
    %183 = arith.cmpi ne, %182, %c0_i32_65 : i32
    scf.if %183 {
      %c0_66 = arith.constant 0 : index
      %c0_67 = arith.constant 0 : index
      %c0_68 = arith.constant 0 : index
      %184 = vector.load %arg16[%c0_66, %c0_67, %c0_68] : memref<1x8x32xf32, #tpu.memory_space<vmem>>, vector<1x8x32xf32>
      %185 = vector.shape_cast %184 : vector<1x8x32xf32> to vector<8x32xf32>
      %186 = vector.shape_cast %179 : vector<8x32xf32> to vector<1x8x32xf32>
      tpu.vector_store %arg16[%c0_66, %c0_67, %c0_68], %186 {strides = array<i32>} : memref<1x8x32xf32, #tpu.memory_space<vmem>>, vector<1x8x32xf32>,
    } else {
    }
    return
  }
  func.func @transform_0(%arg0: i32, %arg1: i32) -> (i32, i32, i32) {
    %c0_i32 = arith.constant 0 : i32
    %c0_i32_0 = arith.constant 0 : i32
    %c0_i32_1 = arith.constant 0 : i32
    return %arg0, %c0_i32, %c0_i32_0 : i32, i32, i32
  }
  func.func @transform_1(%arg0: i32, %arg1: i32) -> (i32, i32, i32, i32) {
    %c0_i32 = arith.constant 0 : i32
    %c0_i32_0 = arith.constant 0 : i32
    %c0_i32_1 = arith.constant 0 : i32
    %c0_i32_2 = arith.constant 0 : i32
    return %arg0, %c0_i32, %c0_i32_0, %c0_i32_1 : i32, i32, i32, i32
  }
  func.func @transform_2(%arg0: i32, %arg1: i32) -> (i32, i32) {
    %c0_i32 = arith.constant 0 : i32
    %c0_i32_0 = arith.constant 0 : i32
    %c0_i32_1 = arith.constant 0 : i32
    return %c0_i32, %c0_i32_0 : i32, i32
  }
  func.func @transform_3(%arg0: i32, %arg1: i32) -> (i32, i32) {
    %c0_i32 = arith.constant 0 : i32
    %c0_i32_0 = arith.constant 0 : i32
    %c0_i32_1 = arith.constant 0 : i32
    return %c0_i32, %c0_i32_0 : i32, i32
  }
  func.func @transform_4(%arg0: i32, %arg1: i32) -> (i32, i32) {
    %c0_i32 = arith.constant 0 : i32
    %c0_i32_0 = arith.constant 0 : i32
    %c0_i32_1 = arith.constant 0 : i32
    return %c0_i32, %c0_i32_0 : i32, i32
  }
  func.func @transform_5(%arg0: i32, %arg1: i32) -> (i32, i32) {
    %c0_i32 = arith.constant 0 : i32
    %c0_i32_0 = arith.constant 0 : i32
    %c0_i32_1 = arith.constant 0 : i32
    return %c0_i32, %c0_i32_0 : i32, i32
  }
  func.func @transform_6(%arg0: i32, %arg1: i32) -> (i32, i32) {
    %c0_i32 = arith.constant 0 : i32
    %c0_i32_0 = arith.constant 0 : i32
    %c0_i32_1 = arith.constant 0 : i32
    return %c0_i32, %c0_i32_0 : i32, i32
  }
  func.func @transform_7(%arg0: i32, %arg1: i32) -> (i32, i32) {
    %c0_i32 = arith.constant 0 : i32
    %c0_i32_0 = arith.constant 0 : i32
    %c0_i32_1 = arith.constant 0 : i32
    return %c0_i32, %c0_i32_0 : i32, i32
  }
  func.func @transform_8(%arg0: i32, %arg1: i32) -> (i32, i32) {
    %c0_i32 = arith.constant 0 : i32
    %c0_i32_0 = arith.constant 0 : i32
    %c0_i32_1 = arith.constant 0 : i32
    return %c0_i32, %c0_i32_0 : i32, i32
  }
  func.func @transform_9(%arg0: i32, %arg1: i32) -> (i32, i32) {
    %c0_i32 = arith.constant 0 : i32
    %c0_i32_0 = arith.constant 0 : i32
    %c0_i32_1 = arith.constant 0 : i32
    return %c0_i32, %c0_i32_0 : i32, i32
  }
  func.func @transform_10(%arg0: i32, %arg1: i32) -> (i32, i32) {
    %c0_i32 = arith.constant 0 : i32
    %c0_i32_0 = arith.constant 0 : i32
    %c0_i32_1 = arith.constant 0 : i32
    return %c0_i32, %c0_i32_0 : i32, i32
  }
  func.func @transform_11(%arg0: i32, %arg1: i32) -> (i32, i32) {
    %c0_i32 = arith.constant 0 : i32
    %c0_i32_0 = arith.constant 0 : i32
    %c0_i32_1 = arith.constant 0 : i32
    return %c0_i32, %c0_i32_0 : i32, i32
  }
  func.func @transform_12(%arg0: i32, %arg1: i32) -> (i32, i32) {
    %c0_i32 = arith.constant 0 : i32
    %c0_i32_0 = arith.constant 0 : i32
    %c0_i32_1 = arith.constant 0 : i32
    return %c0_i32, %c0_i32_0 : i32, i32
  }
  func.func @transform_13(%arg0: i32, %arg1: i32) -> (i32, i32) {
    %c0_i32 = arith.constant 0 : i32
    %c0_i32_0 = arith.constant 0 : i32
    %c0_i32_1 = arith.constant 0 : i32
    return %c0_i32, %c0_i32_0 : i32, i32
  }
  func.func @transform_14(%arg0: i32, %arg1: i32) -> (i32, i32, i32) {
    %c0_i32 = arith.constant 0 : i32
    %c0_i32_0 = arith.constant 0 : i32
    %c0_i32_1 = arith.constant 0 : i32
    return %arg0, %c0_i32, %c0_i32_0 : i32, i32, i32
  }
}

</mosaic_0001>

<llo_original>
// kernel: tpu_custom_call.1
$region0: #{tpu_custom_call.1}
  #allocation0 [shape = 'u32[]', space=smem, size = 0x4, offset = 0x4, fixed_abs, tag = 'smem constant byte address 0x4 - core index']
  #allocation1 [shape = 'u32[144,128]{1,0:T(1,128)}', space=vmem, size = 0x12000, scoped, tag = 'internal scratch']
  #allocation2 [shape = 'f32[8,32]{1,0:T(8,128)}', space=vmem, size = 0x1000, scoped, tag = 'scratch operand']
  %s0 = inlined_call_operand.vmem [shape: f32[2,8,32], index: 0, kind: input, shape index: {}]
  %s1 = inlined_call_operand.vmem [shape: f32[2,1,8,8], index: 1, kind: input, shape index: {}]
  %s2 = inlined_call_operand.vmem [shape: bf16[32,96], index: 2, kind: input, shape index: {}]
  %s3 = inlined_call_operand.vmem [shape: f32[1,96], index: 3, kind: input, shape index: {}]
  %s4 = inlined_call_operand.hbm [shape: bf16[32,32], index: 4, kind: input, shape index: {}]
  %s5 = inlined_call_operand.vmem [shape: f32[1,32], index: 5, kind: input, shape index: {}]
  %s6 = inlined_call_operand.hbm [shape: f32[1,32], index: 6, kind: input, shape index: {}]
  %s7 = inlined_call_operand.hbm [shape: f32[1,32], index: 7, kind: input, shape index: {}]
  %s8 = inlined_call_operand.hbm [shape: f32[1,32], index: 8, kind: input, shape index: {}]
  %s9 = inlined_call_operand.hbm [shape: f32[1,32], index: 9, kind: input, shape index: {}]
  %s10 = inlined_call_operand.vmem [shape: bf16[32,64], index: 10, kind: input, shape index: {}]
  %s11 = inlined_call_operand.vmem [shape: f32[1,64], index: 11, kind: input, shape index: {}]
  %s12 = inlined_call_operand.vmem [shape: bf16[64,32], index: 12, kind: input, shape index: {}]
  %s13 = inlined_call_operand.vmem [shape: f32[1,32], index: 13, kind: input, shape index: {}]
  %s14 = inlined_call_operand.hbm [shape: f32[2,8,32], index: 14, kind: output, shape index: {}]
  %s15 = sld [smem:[#allocation0]]
  $region117: #{tpu_custom_call.1} parent=0
    _
  %s17 = ssub.s32 1, %s15
  %s18 = scalar_select 0, %s17, %s15
  $region1: #{tpu_custom_call.1} parent=0
    #allocation3 [shape = 'u8[8192]{0}', space=vmem, size = 0x2000, scoped, tag = 'input window, operand 4, single buffered']
    #allocation4 [shape = 's32[2]{0}', space=sflag, size = 0x8, scoped, tag = 'scoped memory for tpu_custom_call.1']
    #allocation5 [shape = 's32[2]{0}', space=sflag, size = 0x8, scoped, tag = 'scoped memory for tpu_custom_call.1']
    #allocation6 [shape = 'u8[512]{0}', space=vmem, size = 0x400, scoped, tag = 'input window, operand 6, single buffered']
    #allocation7 [shape = 's32[1]{0}', space=sflag, size = 0x4, scoped, tag = 'scoped memory for tpu_custom_call.1']
    #allocation8 [shape = 'u8[512]{0}', space=vmem, size = 0x400, scoped, tag = 'input window, operand 7, single buffered']
    #allocation9 [shape = 'u8[512]{0}', space=vmem, size = 0x400, scoped, tag = 'input window, operand 8, single buffered']
    #allocation10 [shape = 's32[1]{0}', space=sflag, size = 0x4, scoped, tag = 'scoped memory for tpu_custom_call.1']
    #allocation11 [shape = 'u8[512]{0}', space=vmem, size = 0x400, scoped, tag = 'input window, operand 9, single buffered']
    #allocation12 [shape = 'u8[8192]{0}', space=vmem, size = 0x2000, scoped, tag = 'output window, operand 0']
    %19 = vsyncpa [#allocation4], 0
    %20 = vsyncpa [#allocation7], 0
    %21 = vsyncpa [#allocation10], 0
    %22 = vsyncpa [#allocation5], 0
    %s23 = scalar_lea.sflag [#allocation5], 1
    %24 = vsyncpa %s23, 0
    loop: start=0, step=1, limit=6
    $region2: #{tpu_custom_call.1} parent=1 // loop_pre_header
      _
    $region3: #{tpu_custom_call.1} parent=1 // loop_header
      %s26 = sphi 0, %s30
      %p27 = scmp.ge.s32.totalorder %s26, 6
      %s33 = sphi 0, %s45
      %s34 = sphi 0, %s41
      %s35 = sphi 0, %s33
      %s36 = sphi 0, %s34
      %s37 = sphi 0, %s35
      %s38 = sphi 0, %s36
      %s48 = sphi 0, %s50
      %s51 = sphi 0, %s48
      %s52 = sphi 0, %s51
      %s68 = sphi 0, %s52
      %s74 = sphi 0, %s76
      %s77 = sphi 0, %s74
      %s78 = sphi 0, %s77
      %s94 = sphi 0, %s78
      %s98 = sphi 0, %s98
      %s100 = sphi 0, %s98
      %s101 = sphi 0, %s100
      %s115 = sphi 0, %s101
      %s119 = sphi 0, %s119
      %s121 = sphi 0, %s119
      %s122 = sphi 0, %s121
      %s136 = sphi 0, %s122
      %s140 = sphi 0, %s140
      %s142 = sphi 0, %s140
      %s143 = sphi 0, %s142
      %s157 = sphi 0, %s143
      %s161 = sphi 0, %s161
      %s163 = sphi 0, %s161
      %s164 = sphi 0, %s163
      %s178 = sphi 0, %s164
      %s182 = sphi 0, %s182
      %s184 = sphi 0, %s182
      %s185 = sphi 0, %s184
      %s199 = sphi 0, %s185
      %s203 = sphi 0, %s203
      %s205 = sphi 0, %s203
      %s206 = sphi 0, %s205
      %s220 = sphi 0, %s206
      %s224 = sphi 0, %s224
      %s226 = sphi 0, %s224
      %s227 = sphi 0, %s226
      %s241 = sphi 0, %s227
      %s245 = sphi 0, %s245
      %s247 = sphi 0, %s245
      %s248 = sphi 0, %s247
      %s262 = sphi 0, %s248
      %s266 = sphi 0, %s266
      %s268 = sphi 0, %s266
      %s269 = sphi 0, %s268
      %s283 = sphi 0, %s269
      %s287 = sphi 0, %s287
      %s289 = sphi 0, %s287
      %s290 = sphi 0, %s289
      %s304 = sphi 0, %s290
      %s308 = sphi 0, %s308
      %s310 = sphi 0, %s308
      %s311 = sphi 0, %s310
      %s325 = sphi 0, %s311
      %s329 = sphi 0, %s329
      %s331 = sphi 0, %s329
      %s332 = sphi 0, %s331
      %s346 = sphi 0, %s332
      %s352 = sphi 0, %s354
      %s355 = sphi 0, %s352
      %s356 = sphi 0, %s355
      %s372 = sphi 0, %s356
    $region4: #{tpu_custom_call.1} parent=1 // loop_header_branch
      %29 = sbr.rel (%p27) target = $region8
    $region5: #{tpu_custom_call.1} parent=1 // loop_body
      %s31 = ssub.s32 %s26, 1
      %s32 = ssub.s32 %s26, 2
      %s39 = sadd.s32 1, %s34
      %p40 = scmp.ge.s32.totalorder %s39, 2
      %s41 = scalar_select %p40, 0, %s39
      %s42 = sadd.s32 1, %s33
      %s43 = scalar_select %p40, %s42, %s33
      %p44 = scmp.ge.s32.totalorder %s43, 2
      %s45 = scalar_select %p44, 0, %s43
      %s46 = ssub.s32 %s33, %s45
      %p47 = scmp.eq.s32.totalorder %s46, 0
      %s49 = sadd.s32 %s48, 1
      %s50 = scalar_select %p47, %s48, %s49
      %p53 = pneg %p47
      %p54 = scmp.eq.s32.totalorder %s26, 3
      %p55 = por %p53, %p54
      %p56 = scmp.ne.s32.totalorder %s48, %s51
      %p57 = scmp.eq.s32.totalorder %s26, 0
      %p58 = por %p56, %p57
      %p59 = scmp.ne.s32.totalorder %s48, %s51
      %p60 = scmp.eq.s32.totalorder %s31, 3
      %p61 = por %p59, %p60
      %p62 = scmp.ne.s32.totalorder %s51, %s52
      %p63 = scmp.eq.s32.totalorder %s31, 0
      %p64 = por %p62, %p63
      %p65 = scmp.ne.s32.totalorder %s51, %s52
      %p66 = scmp.eq.s32.totalorder %s32, 3
      %p67 = por %p65, %p66
      %p69 = scmp.ne.s32.totalorder %s52, %s68
      %p70 = scmp.eq.s32.totalorder %s32, 0
      %p71 = por %p69, %p70
      %s72 = ssub.s32 %s33, %s45
      %p73 = scmp.eq.s32.totalorder %s72, 0
      %s75 = sadd.s32 %s74, 1
      %s76 = scalar_select %p73, %s74, %s75
      %p79 = pneg %p73
      %p80 = scmp.eq.s32.totalorder %s26, 3
      %p81 = por %p79, %p80
      %p82 = scmp.ne.s32.totalorder %s74, %s77
      %p83 = scmp.eq.s32.totalorder %s26, 0
      %p84 = por %p82, %p83
      %p85 = scmp.ne.s32.totalorder %s74, %s77
      %p86 = scmp.eq.s32.totalorder %s31, 3
      %p87 = por %p85, %p86
      %p88 = scmp.ne.s32.totalorder %s77, %s78
      %p89 = scmp.eq.s32.totalorder %s31, 0
      %p90 = por %p88, %p89
      %p91 = scmp.ne.s32.totalorder %s77, %s78
      %p92 = scmp.eq.s32.totalorder %s32, 3
      %p93 = por %p91, %p92
      %p95 = scmp.ne.s32.totalorder %s78, %s94
      %p96 = scmp.eq.s32.totalorder %s32, 0
      %p97 = por %p95, %p96
      %s99 = sadd.s32 %s98, 1
      %p102 = scmp.eq.s32.totalorder %s26, 3
      %p103 = scmp.ne.s32.totalorder %s98, %s100
      %p104 = scmp.eq.s32.totalorder %s26, 0
      %p105 = por %p103, %p104
      %p106 = scmp.ne.s32.totalorder %s98, %s100
      %p107 = scmp.eq.s32.totalorder %s31, 3
      %p108 = por %p106, %p107
      %p109 = scmp.ne.s32.totalorder %s100, %s101
      %p110 = scmp.eq.s32.totalorder %s31, 0
      %p111 = por %p109, %p110
      %p112 = scmp.ne.s32.totalorder %s100, %s101
      %p113 = scmp.eq.s32.totalorder %s32, 3
      %p114 = por %p112, %p113
      %p116 = scmp.ne.s32.totalorder %s101, %s115
      %p117 = scmp.eq.s32.totalorder %s32, 0
      %p118 = por %p116, %p117
      %s120 = sadd.s32 %s119, 1
      %p123 = scmp.eq.s32.totalorder %s26, 3
      %p124 = scmp.ne.s32.totalorder %s119, %s121
      %p125 = scmp.eq.s32.totalorder %s26, 0
      %p126 = por %p124, %p125
      %p127 = scmp.ne.s32.totalorder %s119, %s121
      %p128 = scmp.eq.s32.totalorder %s31, 3
      %p129 = por %p127, %p128
      %p130 = scmp.ne.s32.totalorder %s121, %s122
      %p131 = scmp.eq.s32.totalorder %s31, 0
      %p132 = por %p130, %p131
      %p133 = scmp.ne.s32.totalorder %s121, %s122
      %p134 = scmp.eq.s32.totalorder %s32, 3
      %p135 = por %p133, %p134
      %p137 = scmp.ne.s32.totalorder %s122, %s136
      %p138 = scmp.eq.s32.totalorder %s32, 0
      %p139 = por %p137, %p138
      %s141 = sadd.s32 %s140, 1
      %p144 = scmp.eq.s32.totalorder %s26, 3
      %p145 = scmp.ne.s32.totalorder %s140, %s142
      %p146 = scmp.eq.s32.totalorder %s26, 0
      %p147 = por %p145, %p146
      %p148 = scmp.ne.s32.totalorder %s140, %s142
      %p149 = scmp.eq.s32.totalorder %s31, 3
      %p150 = por %p148, %p149
      %p151 = scmp.ne.s32.totalorder %s142, %s143
      %p152 = scmp.eq.s32.totalorder %s31, 0
      %p153 = por %p151, %p152
      %p154 = scmp.ne.s32.totalorder %s142, %s143
      %p155 = scmp.eq.s32.totalorder %s32, 3
      %p156 = por %p154, %p155
      %p158 = scmp.ne.s32.totalorder %s143, %s157
      %p159 = scmp.eq.s32.totalorder %s32, 0
      %p160 = por %p158, %p159
      %s162 = sadd.s32 %s161, 1
      %p165 = scmp.eq.s32.totalorder %s26, 3
      %p166 = scmp.ne.s32.totalorder %s161, %s163
      %p167 = scmp.eq.s32.totalorder %s26, 0
      %p168 = por %p166, %p167
      %p169 = scmp.ne.s32.totalorder %s161, %s163
      %p170 = scmp.eq.s32.totalorder %s31, 3
      %p171 = por %p169, %p170
      %p172 = scmp.ne.s32.totalorder %s163, %s164
      %p173 = scmp.eq.s32.totalorder %s31, 0
      %p174 = por %p172, %p173
      %p175 = scmp.ne.s32.totalorder %s163, %s164
      %p176 = scmp.eq.s32.totalorder %s32, 3
      %p177 = por %p175, %p176
      %p179 = scmp.ne.s32.totalorder %s164, %s178
      %p180 = scmp.eq.s32.totalorder %s32, 0
      %p181 = por %p179, %p180
      %s183 = sadd.s32 %s182, 1
      %p186 = scmp.eq.s32.totalorder %s26, 3
      %p187 = scmp.ne.s32.totalorder %s182, %s184
      %p188 = scmp.eq.s32.totalorder %s26, 0
      %p189 = por %p187, %p188
      %p190 = scmp.ne.s32.totalorder %s182, %s184
      %p191 = scmp.eq.s32.totalorder %s31, 3
      %p192 = por %p190, %p191
      %p193 = scmp.ne.s32.totalorder %s184, %s185
      %p194 = scmp.eq.s32.totalorder %s31, 0
      %p195 = por %p193, %p194
      %p196 = scmp.ne.s32.totalorder %s184, %s185
      %p197 = scmp.eq.s32.totalorder %s32, 3
      %p198 = por %p196, %p197
      %p200 = scmp.ne.s32.totalorder %s185, %s199
      %p201 = scmp.eq.s32.totalorder %s32, 0
      %p202 = por %p200, %p201
      %s204 = sadd.s32 %s203, 1
      %p207 = scmp.eq.s32.totalorder %s26, 3
      %p208 = scmp.ne.s32.totalorder %s203, %s205
      %p209 = scmp.eq.s32.totalorder %s26, 0
      %p210 = por %p208, %p209
      %p211 = scmp.ne.s32.totalorder %s203, %s205
      %p212 = scmp.eq.s32.totalorder %s31, 3
      %p213 = por %p211, %p212
      %p214 = scmp.ne.s32.totalorder %s205, %s206
      %p215 = scmp.eq.s32.totalorder %s31, 0
      %p216 = por %p214, %p215
      %p217 = scmp.ne.s32.totalorder %s205, %s206
      %p218 = scmp.eq.s32.totalorder %s32, 3
      %p219 = por %p217, %p218
      %p221 = scmp.ne.s32.totalorder %s206, %s220
      %p222 = scmp.eq.s32.totalorder %s32, 0
      %p223 = por %p221, %p222
      %s225 = sadd.s32 %s224, 1
      %p228 = scmp.eq.s32.totalorder %s26, 3
      %p229 = scmp.ne.s32.totalorder %s224, %s226
      %p230 = scmp.eq.s32.totalorder %s26, 0
      %p231 = por %p229, %p230
      %p232 = scmp.ne.s32.totalorder %s224, %s226
      %p233 = scmp.eq.s32.totalorder %s31, 3
      %p234 = por %p232, %p233
      %p235 = scmp.ne.s32.totalorder %s226, %s227
      %p236 = scmp.eq.s32.totalorder %s31, 0
      %p237 = por %p235, %p236
      %p238 = scmp.ne.s32.totalorder %s226, %s227
      %p239 = scmp.eq.s32.totalorder %s32, 3
      %p240 = por %p238, %p239
      %p242 = scmp.ne.s32.totalorder %s227, %s241
      %p243 = scmp.eq.s32.totalorder %s32, 0
      %p244 = por %p242, %p243
      %s246 = sadd.s32 %s245, 1
      %p249 = scmp.eq.s32.totalorder %s26, 3
      %p250 = scmp.ne.s32.totalorder %s245, %s247
      %p251 = scmp.eq.s32.totalorder %s26, 0
      %p252 = por %p250, %p251
      %p253 = scmp.ne.s32.totalorder %s245, %s247
      %p254 = scmp.eq.s32.totalorder %s31, 3
      %p255 = por %p253, %p254
      %p256 = scmp.ne.s32.totalorder %s247, %s248
      %p257 = scmp.eq.s32.totalorder %s31, 0
      %p258 = por %p256, %p257
      %p259 = scmp.ne.s32.totalorder %s247, %s248
      %p260 = scmp.eq.s32.totalorder %s32, 3
      %p261 = por %p259, %p260
      %p263 = scmp.ne.s32.totalorder %s248, %s262
      %p264 = scmp.eq.s32.totalorder %s32, 0
      %p265 = por %p263, %p264
      %s267 = sadd.s32 %s266, 1
      %p270 = scmp.eq.s32.totalorder %s26, 3
      %p271 = scmp.ne.s32.totalorder %s266, %s268
      %p272 = scmp.eq.s32.totalorder %s26, 0
      %p273 = por %p271, %p272
      %p274 = scmp.ne.s32.totalorder %s266, %s268
      %p275 = scmp.eq.s32.totalorder %s31, 3
      %p276 = por %p274, %p275
      %p277 = scmp.ne.s32.totalorder %s268, %s269
      %p278 = scmp.eq.s32.totalorder %s31, 0
      %p279 = por %p277, %p278
      %p280 = scmp.ne.s32.totalorder %s268, %s269
      %p281 = scmp.eq.s32.totalorder %s32, 3
      %p282 = por %p280, %p281
      %p284 = scmp.ne.s32.totalorder %s269, %s283
      %p285 = scmp.eq.s32.totalorder %s32, 0
      %p286 = por %p284, %p285
      %s288 = sadd.s32 %s287, 1
      %p291 = scmp.eq.s32.totalorder %s26, 3
      %p292 = scmp.ne.s32.totalorder %s287, %s289
      %p293 = scmp.eq.s32.totalorder %s26, 0
      %p294 = por %p292, %p293
      %p295 = scmp.ne.s32.totalorder %s287, %s289
      %p296 = scmp.eq.s32.totalorder %s31, 3
      %p297 = por %p295, %p296
      %p298 = scmp.ne.s32.totalorder %s289, %s290
      %p299 = scmp.eq.s32.totalorder %s31, 0
      %p300 = por %p298, %p299
      %p301 = scmp.ne.s32.totalorder %s289, %s290
      %p302 = scmp.eq.s32.totalorder %s32, 3
      %p303 = por %p301, %p302
      %p305 = scmp.ne.s32.totalorder %s290, %s304
      %p306 = scmp.eq.s32.totalorder %s32, 0
      %p307 = por %p305, %p306
      %s309 = sadd.s32 %s308, 1
      %p312 = scmp.eq.s32.totalorder %s26, 3
      %p313 = scmp.ne.s32.totalorder %s308, %s310
      %p314 = scmp.eq.s32.totalorder %s26, 0
      %p315 = por %p313, %p314
      %p316 = scmp.ne.s32.totalorder %s308, %s310
      %p317 = scmp.eq.s32.totalorder %s31, 3
      %p318 = por %p316, %p317
      %p319 = scmp.ne.s32.totalorder %s310, %s311
      %p320 = scmp.eq.s32.totalorder %s31, 0
      %p321 = por %p319, %p320
      %p322 = scmp.ne.s32.totalorder %s310, %s311
      %p323 = scmp.eq.s32.totalorder %s32, 3
      %p324 = por %p322, %p323
      %p326 = scmp.ne.s32.totalorder %s311, %s325
      %p327 = scmp.eq.s32.totalorder %s32, 0
      %p328 = por %p326, %p327
      %s330 = sadd.s32 %s329, 1
      %p333 = scmp.eq.s32.totalorder %s26, 3
      %p334 = scmp.ne.s32.totalorder %s329, %s331
      %p335 = scmp.eq.s32.totalorder %s26, 0
      %p336 = por %p334, %p335
      %p337 = scmp.ne.s32.totalorder %s329, %s331
      %p338 = scmp.eq.s32.totalorder %s31, 3
      %p339 = por %p337, %p338
      %p340 = scmp.ne.s32.totalorder %s331, %s332
      %p341 = scmp.eq.s32.totalorder %s31, 0
      %p342 = por %p340, %p341
      %p343 = scmp.ne.s32.totalorder %s331, %s332
      %p344 = scmp.eq.s32.totalorder %s32, 3
      %p345 = por %p343, %p344
      %p347 = scmp.ne.s32.totalorder %s332, %s346
      %p348 = scmp.eq.s32.totalorder %s32, 0
      %p349 = por %p347, %p348
      %s350 = ssub.s32 %s33, %s45
      %p351 = scmp.eq.s32.totalorder %s350, 0
      %s353 = sadd.s32 %s352, 1
      %s354 = scalar_select %p351, %s352, %s353
      %p357 = pneg %p351
      %p358 = scmp.eq.s32.totalorder %s26, 3
      %p359 = por %p357, %p358
      %p360 = scmp.ne.s32.totalorder %s352, %s355
      %p361 = scmp.eq.s32.totalorder %s26, 0
      %p362 = por %p360, %p361
      %p363 = scmp.ne.s32.totalorder %s352, %s355
      %p364 = scmp.eq.s32.totalorder %s31, 3
      %p365 = por %p363, %p364
      %p366 = scmp.ne.s32.totalorder %s355, %s356
      %p367 = scmp.eq.s32.totalorder %s31, 0
      %p368 = por %p366, %p367
      %p369 = scmp.ne.s32.totalorder %s355, %s356
      %p370 = scmp.eq.s32.totalorder %s32, 3
      %p371 = por %p369, %p370
      %p373 = scmp.ne.s32.totalorder %s356, %s372
      %p374 = scmp.eq.s32.totalorder %s32, 0
      %p375 = por %p373, %p374
      %p376 = scmp.le.s32.totalorder 1, %s26
      %p377 = scmp.lt.s32.totalorder %s26, 5
      %p378 = pnand %p376, %p377
      %p379 = pneg %p378
      // Predicated region
      $region9: #{tpu_custom_call.1} parent=5 // pred_check
        _
      $region10: #{tpu_custom_call.1} parent=5 // pred_check_branch
        %381 = sbr.rel (%p378) target = $region12
      $region11: #{tpu_custom_call.1} parent=5 // pred_region
        %s382 = ssub.s32 %s26, 1
        // Predicated region
        $region13: #{tpu_custom_call.1} parent=11 // pred_check
          %p383 = pneg %p111
        $region14: #{tpu_custom_call.1} parent=11 // pred_check_branch
          %385 = sbr.rel (%p383) target = $region16
        $region15: #{tpu_custom_call.1} parent=11 // pred_region
          _
        $region16: #{tpu_custom_call.1} parent=11 // pred_fallthru
          _
        // Predicated region
        $region17: #{tpu_custom_call.1} parent=11 // pred_check
          %p386 = pneg %p132
        $region18: #{tpu_custom_call.1} parent=11 // pred_check_branch
          %388 = sbr.rel (%p386) target = $region20
        $region19: #{tpu_custom_call.1} parent=11 // pred_region
          _
        $region20: #{tpu_custom_call.1} parent=11 // pred_fallthru
          _
        // Predicated region
        $region21: #{tpu_custom_call.1} parent=11 // pred_check
          %p389 = pneg %p153
        $region22: #{tpu_custom_call.1} parent=11 // pred_check_branch
          %391 = sbr.rel (%p389) target = $region24
        $region23: #{tpu_custom_call.1} parent=11 // pred_region
          %s393 = ssub.s32 256, 256
          %394 = vsyncadd [#allocation4], %s393
          %s395 = sshll.u32 [#allocation3], 4
          %s396 = int_to_ptr.vmem [resolvable:$true] %s395
          %401 = dma.hbm_to_vmem [thread:$0]  %s4, 256, %s396, [#allocation4], 64, 64, 4
        $region24: #{tpu_custom_call.1} parent=11 // pred_fallthru
          _
        // Predicated region
        $region25: #{tpu_custom_call.1} parent=11 // pred_check
          %p402 = pneg %p174
        $region26: #{tpu_custom_call.1} parent=11 // pred_check_branch
          %404 = sbr.rel (%p402) target = $region28
        $region27: #{tpu_custom_call.1} parent=11 // pred_region
          _
        $region28: #{tpu_custom_call.1} parent=11 // pred_fallthru
          _
        // Predicated region
        $region29: #{tpu_custom_call.1} parent=11 // pred_check
          %p405 = pneg %p195
        $region30: #{tpu_custom_call.1} parent=11 // pred_check_branch
          %407 = sbr.rel (%p405) target = $region32
        $region31: #{tpu_custom_call.1} parent=11 // pred_region
          %s409 = ssub.s32 16, 16
          %410 = vsyncadd [#allocation7], %s409
          %s412 = sshll.u32 [#allocation6], 4
          %s413 = int_to_ptr.vmem [resolvable:$true] %s412
          %415 = dma.hbm_to_vmem [thread:$0]  %s6, 16, %s413, [#allocation7]
        $region32: #{tpu_custom_call.1} parent=11 // pred_fallthru
          _
        // Predicated region
        $region33: #{tpu_custom_call.1} parent=11 // pred_check
          %p416 = pneg %p216
        $region34: #{tpu_custom_call.1} parent=11 // pred_check_branch
          %418 = sbr.rel (%p416) target = $region36
        $region35: #{tpu_custom_call.1} parent=11 // pred_region
          %s420 = ssub.s32 16, 16
          %421 = vsyncadd [#allocation7], %s420
          %s423 = sshll.u32 [#allocation8], 4
          %s424 = int_to_ptr.vmem [resolvable:$true] %s423
          %426 = dma.hbm_to_vmem [thread:$0]  %s7, 16, %s424, [#allocation7]
        $region36: #{tpu_custom_call.1} parent=11 // pred_fallthru
          _
        // Predicated region
        $region37: #{tpu_custom_call.1} parent=11 // pred_check
          %p427 = pneg %p237
        $region38: #{tpu_custom_call.1} parent=11 // pred_check_branch
          %429 = sbr.rel (%p427) target = $region40
        $region39: #{tpu_custom_call.1} parent=11 // pred_region
          %s431 = ssub.s32 16, 16
          %432 = vsyncadd [#allocation10], %s431
          %s434 = sshll.u32 [#allocation9], 4
          %s435 = int_to_ptr.vmem [resolvable:$true] %s434
          %437 = dma.hbm_to_vmem [thread:$0]  %s8, 16, %s435, [#allocation10]
        $region40: #{tpu_custom_call.1} parent=11 // pred_fallthru
          _
        // Predicated region
        $region41: #{tpu_custom_call.1} parent=11 // pred_check
          %p438 = pneg %p258
        $region42: #{tpu_custom_call.1} parent=11 // pred_check_branch
          %440 = sbr.rel (%p438) target = $region44
        $region43: #{tpu_custom_call.1} parent=11 // pred_region
          %s442 = ssub.s32 16, 16
          %443 = vsyncadd [#allocation10], %s442
          %s445 = sshll.u32 [#allocation11], 4
          %s446 = int_to_ptr.vmem [resolvable:$true] %s445
          %448 = dma.hbm_to_vmem [thread:$0]  %s9, 16, %s446, [#allocation10]
        $region44: #{tpu_custom_call.1} parent=11 // pred_fallthru
          _
        // Predicated region
        $region45: #{tpu_custom_call.1} parent=11 // pred_check
          %p449 = pneg %p279
        $region46: #{tpu_custom_call.1} parent=11 // pred_check_branch
          %451 = sbr.rel (%p449) target = $region48
        $region47: #{tpu_custom_call.1} parent=11 // pred_region
          _
        $region48: #{tpu_custom_call.1} parent=11 // pred_fallthru
          _
        // Predicated region
        $region49: #{tpu_custom_call.1} parent=11 // pred_check
          %p452 = pneg %p300
        $region50: #{tpu_custom_call.1} parent=11 // pred_check_branch
          %454 = sbr.rel (%p452) target = $region52
        $region51: #{tpu_custom_call.1} parent=11 // pred_region
          _
        $region52: #{tpu_custom_call.1} parent=11 // pred_fallthru
          _
        // Predicated region
        $region53: #{tpu_custom_call.1} parent=11 // pred_check
          %p455 = pneg %p321
        $region54: #{tpu_custom_call.1} parent=11 // pred_check_branch
          %457 = sbr.rel (%p455) target = $region56
        $region55: #{tpu_custom_call.1} parent=11 // pred_region
          _
        $region56: #{tpu_custom_call.1} parent=11 // pred_fallthru
          _
        // Predicated region
        $region57: #{tpu_custom_call.1} parent=11 // pred_check
          %p458 = pneg %p342
        $region58: #{tpu_custom_call.1} parent=11 // pred_check_branch
          %460 = sbr.rel (%p458) target = $region60
        $region59: #{tpu_custom_call.1} parent=11 // pred_region
          _
        $region60: #{tpu_custom_call.1} parent=11 // pred_fallthru
          _
      $region12: #{tpu_custom_call.1} parent=5 // pred_fallthru
        _
      %p461 = scmp.lt.s32.totalorder %s26, 4
      // Predicated region
      $region61: #{tpu_custom_call.1} parent=5 // pred_check
        %p462 = pneg %p461
      $region62: #{tpu_custom_call.1} parent=5 // pred_check_branch
        %464 = sbr.rel (%p462) target = $region64
      $region63: #{tpu_custom_call.1} parent=5 // pred_region
        // Predicated region
        $region65: #{tpu_custom_call.1} parent=63 // pred_check
          %p465 = pneg %p58
        $region66: #{tpu_custom_call.1} parent=63 // pred_check_branch
          %467 = sbr.rel (%p465) target = $region68
        $region67: #{tpu_custom_call.1} parent=63 // pred_region
          %p468 = scmp.lt.s32.totalorder %s33, 1
          %s469 = scalar_select %p468, %s33, 1
          %s470 = smul.addr %s469, 8
          %s471 = scalar_lea.vmem %s0, %s470
        $region68: #{tpu_custom_call.1} parent=63 // pred_fallthru
          _
        // Predicated region
        $region69: #{tpu_custom_call.1} parent=63 // pred_check
          %p472 = pneg %p84
        $region70: #{tpu_custom_call.1} parent=63 // pred_check_branch
          %474 = sbr.rel (%p472) target = $region72
        $region71: #{tpu_custom_call.1} parent=63 // pred_region
          %p475 = scmp.lt.s32.totalorder %s33, 1
          %s476 = scalar_select %p475, %s33, 1
          %s477 = smul.addr %s476, 8
          %s478 = scalar_lea.vmem %s1, %s477
        $region72: #{tpu_custom_call.1} parent=63 // pred_fallthru
          _
      $region64: #{tpu_custom_call.1} parent=5 // pred_fallthru
        _
      %p479 = scmp.le.s32.totalorder 1, %s26
      %p480 = scmp.lt.s32.totalorder %s26, 5
      %p481 = pnand %p479, %p480
      %p482 = pneg %p481
      // Predicated region
      $region73: #{tpu_custom_call.1} parent=5 // pred_check
        _
      $region74: #{tpu_custom_call.1} parent=5 // pred_check_branch
        %484 = sbr.rel (%p481) target = $region76
      $region75: #{tpu_custom_call.1} parent=5 // pred_region
        %s485 = ssub.s32 %s26, 1
        // Predicated region
        $region77: #{tpu_custom_call.1} parent=75 // pred_check
          %p486 = pneg %p153
        $region78: #{tpu_custom_call.1} parent=75 // pred_check_branch
          %488 = sbr.rel (%p486) target = $region80
        $region79: #{tpu_custom_call.1} parent=75 // pred_region
          %489 = dma.done [#allocation4], 256
        $region80: #{tpu_custom_call.1} parent=75 // pred_fallthru
          _
        // Predicated region
        $region81: #{tpu_custom_call.1} parent=75 // pred_check
          %p490 = pneg %p195
        $region82: #{tpu_custom_call.1} parent=75 // pred_check_branch
          %492 = sbr.rel (%p490) target = $region84
        $region83: #{tpu_custom_call.1} parent=75 // pred_region
          %493 = dma.done [#allocation7], 16
        $region84: #{tpu_custom_call.1} parent=75 // pred_fallthru
          _
        // Predicated region
        $region85: #{tpu_custom_call.1} parent=75 // pred_check
          %p494 = pneg %p216
        $region86: #{tpu_custom_call.1} parent=75 // pred_check_branch
          %496 = sbr.rel (%p494) target = $region88
        $region87: #{tpu_custom_call.1} parent=75 // pred_region
          %497 = dma.done [#allocation7], 16
        $region88: #{tpu_custom_call.1} parent=75 // pred_fallthru
          _
        // Predicated region
        $region89: #{tpu_custom_call.1} parent=75 // pred_check
          %p498 = pneg %p237
        $region90: #{tpu_custom_call.1} parent=75 // pred_check_branch
          %500 = sbr.rel (%p498) target = $region92
        $region91: #{tpu_custom_call.1} parent=75 // pred_region
          %501 = dma.done [#allocation10], 16
        $region92: #{tpu_custom_call.1} parent=75 // pred_fallthru
          _
        // Predicated region
        $region93: #{tpu_custom_call.1} parent=75 // pred_check
          %p502 = pneg %p258
        $region94: #{tpu_custom_call.1} parent=75 // pred_check_branch
          %504 = sbr.rel (%p502) target = $region96
        $region95: #{tpu_custom_call.1} parent=75 // pred_region
          %505 = dma.done [#allocation10], 16
        $region96: #{tpu_custom_call.1} parent=75 // pred_fallthru
          _
        %p506 = scmp.lt.s32.totalorder %s35, 1
        %s507 = scalar_select %p506, %s35, 1
        %s508 = smul.addr %s507, 8
        %s509 = scalar_lea.vmem %s0, %s508
        %p510 = pneg %p64
        %p511 = pneg %p61
        %p512 = scmp.lt.s32.totalorder %s35, 1
        %s513 = scalar_select %p512, %s35, 1
        %s514 = smul.addr %s513, 8
        %s515 = scalar_lea.vmem %s1, %s514
        %p516 = pneg %p90
        %p517 = pneg %p87
        %p518 = pneg %p111
        %p519 = pneg %p108
        %p520 = pneg %p132
        %p521 = pneg %p129
        %p522 = pneg %p153
        %p523 = pneg %p150
        %p524 = pneg %p174
        %p525 = pneg %p171
        %p526 = pneg %p195
        %p527 = pneg %p192
        %p528 = pneg %p216
        %p529 = pneg %p213
        %p530 = pneg %p237
        %p531 = pneg %p234
        %p532 = pneg %p258
        %p533 = pneg %p255
        %p534 = pneg %p279
        %p535 = pneg %p276
        %p536 = pneg %p300
        %p537 = pneg %p297
        %p538 = pneg %p321
        %p539 = pneg %p318
        %p540 = pneg %p342
        %p541 = pneg %p339
        %p542 = pneg %p368
        %p543 = pneg %p365
        %s544 = sand.u32 %s355, 1
        %s545 = scalar_lea.sflag [#allocation5], %s544
        %s546 = sand.u32 %s355, 1
        %s547 = smul.addr %s546, 8
        %s548 = scalar_lea.vmem [#allocation12], %s547
        %p549 = scmp.lt.s32.totalorder %s35, 1
        %s550 = scalar_select %p549, %s35, 1
        %s551 = smul.addr %s550, 8
        %s552 = scalar_lea.vmem %s0, %s551
        %p553 = scmp.lt.s32.totalorder %s35, 1
        %s554 = scalar_select %p553, %s35, 1
        %s555 = smul.addr %s554, 8
        %s556 = scalar_lea.vmem %s1, %s555
        %p558 = scmp.eq.s32.totalorder %s36, 0
        // Predicated region
        $region97: #{tpu_custom_call.1} parent=75 // pred_check
          %p559 = pneg %p558
        $region98: #{tpu_custom_call.1} parent=75 // pred_check_branch
          %561 = sbr.rel (%p559) target = $region100
        $region99: #{tpu_custom_call.1} parent=75 // pred_region
          %v562 = vld [vmem:[%s552] sm:$0xff]
          %vm563 = vcmask 261120
          %564 = vst.msk [vmem:[#allocation2] sm:$0xff] %vm563, %v562
        $region100: #{tpu_custom_call.1} parent=75 // pred_fallthru
          _
        %v565 = vld [vmem:[#allocation2] sm:$0xff]
        %v566 = vld [vmem:[%s556] sm:$0xff]
        %v567 = vld [vmem:[#allocation6] sm:$0x1]
        %v568 = vld [vmem:[#allocation8] sm:$0x1]
        %vm569 = vcmask 261120
        %v570 = vsel %vm569, %v565, 0.0
        %571 = vadd.xlane.f32.xlu0 %v570
        %v572 = vpop.xlane.xlu0 %571
        %v573 = vrcp.pop 32.0
        %v574 = vmul.f32 %v572, %v573
        %v575 = vsub.f32 %v565, %v574
        %v576 = vmul.f32 %v575, %v575
        %v577 = vsel %vm569, %v576, 0.0
        %578 = vadd.xlane.f32.xlu0 %v577
        %v579 = vpop.xlane.xlu0 %578
        %v580 = vmul.f32 %v579, %v573
        %v581 = vadd.f32 %v580, 1e-05
        %v582 = vrsqrt.pop %v581
        %v583 = vmul.f32 %v575, %v582
        %v585 = vlaneseq
        %v586 = vshrl.u32 %v585, 7
        %v587 = vsub.s32 0, %v586
        %v588 = vrot.slane %v567, %v587
        %v590 = vmul.f32 %v583, %v588
        %v592 = vlaneseq
        %v593 = vshrl.u32 %v592, 7
        %v594 = vsub.s32 0, %v593
        %v595 = vrot.slane %v568, %v594
        %v597 = vadd.f32 %v590, %v595
        %v598 = vpack.c.bf16 %v597, %v597
        %v599 = vld [vmem:[%s2] sm:$0xf]
        %v600 = vld [vmem:[%s2 + $0x4] sm:$0xf]
        %v601 = vld [vmem:[%s2 + $0x8] sm:$0xf]
        %v602 = vld [vmem:[%s2 + $0xc] sm:$0xf]
        %v603 = vld [vmem:[%s3] sm:$0x1]
        %v605 = vlaneseq
        %v606 = vshrl.u32 %v605, 7
        %v607 = vsub.s32 0, %v606
        %v608 = vrot.slane %v603, %v607
        %v614 = vunpack.c.l.b16 %v599
        %v615 = vunpack.c.l.b16 %v600
        %v616 = vunpack.c.l.b16 %v601
        %v617 = vunpack.c.l.b16 %v602
        %v618 = vpack.c.b16 %v615, %v614
        %v619 = vpack.c.b16 %v617, %v616
        %v623 = vsel %vm569, %v598, 0
        %625 = vmatprep.subr.bf16.mxu0 0
        %626 = vmatpush1.bf16.msra.mxu0 %v618
        %627 = vmatprep.subr.bf16.mxu0 0
        %628 = vmatpush1.bf16.msra.mxu0 %v619
        %629 = vmatprep.subr.bf16.mxu0 0
        %630 = vmatpush1.bf16.msra.mxu0 0
        %631 = vmatprep.subr.bf16.mxu0 0
        %632 = vmatpush1.bf16.msra.mxu0 0
        %633 = vmatprep.subr.bf16.mxu0 0
        %634 = vmatpush1.bf16.msra.mxu0 0
        %635 = vmatprep.subr.bf16.mxu0 0
        %636 = vmatpush1.bf16.msra.mxu0 0
        %637 = vmatprep.subr.bf16.mxu0 0
        %638 = vmatpush1.bf16.msra.mxu0 0
        %639 = vmatprep.subr.bf16.mxu0 0
        %640 = vmatpush1.bf16.msra.mxu0 0
        %641 = vmatprep.subr.bf16.mxu0 0
        %642 = vmatpush1.bf16.msra.mxu0 0
        %643 = vmatprep.subr.bf16.mxu0 0
        %644 = vmatpush1.bf16.msra.mxu0 0
        %645 = vmatprep.subr.bf16.mxu0 0
        %646 = vmatpush1.bf16.msra.mxu0 0
        %647 = vmatprep.subr.bf16.mxu0 0
        %648 = vmatpush1.bf16.msra.mxu0 0
        %649 = vmatprep.subr.bf16.mxu0 0
        %650 = vmatpush1.bf16.msra.mxu0 0
        %651 = vmatprep.subr.bf16.mxu0 0
        %652 = vmatpush1.bf16.msra.mxu0 0
        %653 = vmatprep.subr.bf16.mxu0 0
        %654 = vmatpush1.bf16.msra.mxu0 0
        %655 = vmatprep.subr.bf16.mxu0 0
        %656 = vmatpush1.bf16.msra.mxu0 0
        %657 = vmatprep.mubr.bf16.mxu0 0
        %658 = vmatmul.mubr.bf16.gmra.mrb[0].mxu0 %v623
        %v659 = vpop.f32.mrb[0].mxu0
        %v660 = vadd.f32 %v608, %v659
        %v661 = vpop.f32.mrb[0].mxu0
        %v662 = vpop.f32.mrb[0].mxu0
        %v663 = vpop.f32.mrb[0].mxu0
        %664 = vdwg.mxu0
        %v665 = vpack.c.bf16 %v660, %v660
        %667 = vrot.lane.b32.xlu0 %v665, 96
        %v668 = vpop.permute.xlu0 %667
        %vm669 = vcmask 64512
        %v671 = vsel %vm669, %v665, 0
        %v674 = vsel %vm669, %v668, 0
        %676 = vmatprep.subr.bf16.mxu0 0
        %677 = vmatpush1.bf16.xpose.msra.mxu0 %v674
        %678 = vmatprep.subr.bf16.mxu0 0
        %679 = vmatpush1.bf16.xpose.msra.mxu0 0
        %680 = vmatprep.subr.bf16.mxu0 0
        %681 = vmatpush1.bf16.xpose.msra.mxu0 0
        %682 = vmatprep.subr.bf16.mxu0 0
        %683 = vmatpush1.bf16.xpose.msra.mxu0 0
        %684 = vmatprep.subr.bf16.mxu0 0
        %685 = vmatpush1.bf16.xpose.msra.mxu0 0
        %686 = vmatprep.subr.bf16.mxu0 0
        %687 = vmatpush1.bf16.xpose.msra.mxu0 0
        %688 = vmatprep.subr.bf16.mxu0 0
        %689 = vmatpush1.bf16.xpose.msra.mxu0 0
        %690 = vmatprep.subr.bf16.mxu0 0
        %691 = vmatpush1.bf16.xpose.msra.mxu0 0
        %692 = vmatprep.subr.bf16.mxu0 0
        %693 = vmatpush1.bf16.xpose.msra.mxu0 0
        %694 = vmatprep.subr.bf16.mxu0 0
        %695 = vmatpush1.bf16.xpose.msra.mxu0 0
        %696 = vmatprep.subr.bf16.mxu0 0
        %697 = vmatpush1.bf16.xpose.msra.mxu0 0
        %698 = vmatprep.subr.bf16.mxu0 0
        %699 = vmatpush1.bf16.xpose.msra.mxu0 0
        %700 = vmatprep.subr.bf16.mxu0 0
        %701 = vmatpush1.bf16.xpose.msra.mxu0 0
        %702 = vmatprep.subr.bf16.mxu0 0
        %703 = vmatpush1.bf16.xpose.msra.mxu0 0
        %704 = vmatprep.subr.bf16.mxu0 0
        %705 = vmatpush1.bf16.xpose.msra.mxu0 0
        %706 = vmatprep.subr.bf16.mxu0 0
        %707 = vmatpush1.bf16.xpose.msra.mxu0 0
        %708 = vmatprep.mubr.bf16.mxu0 0
        %709 = vmatmul.mubr.bf16.gmra.mrb[0].mxu0 %v671
        %v710 = vpop.f32.mrb[0].mxu0
        %v711 = vadd.f32 %v566, %v710
        %v712 = vpop.f32.mrb[0].mxu0
        %v713 = vpop.f32.mrb[0].mxu0
        %v714 = vpop.f32.mrb[0].mxu0
        %715 = vdwg.mxu0
        %v716 = vsel %vm669, %v711, -inf
        %717 = vmax.xlane.f32.xlu0 %v716
        %v718 = vpop.xlane.xlu0 %717
        %v719 = vsub.f32 %v711, %v718
        %v720 = vmul.f32 %v719, 1.442695
        %v721 = vpow.pop %v720
        %v722 = vsel %vm669, %v721, 0.0
        %723 = vadd.xlane.f32.xlu0 %v722
        %v724 = vpop.xlane.xlu0 %723
        %v725 = vpack.c.bf16 %v721, %v721
        %726 = vrot.lane.b32.xlu0 %v665, 64
        %v727 = vpop.permute.xlu0 %726
        %v729 = vsel %vm669, %v725, 0
        %vm731 = vcmask 1043456
        %v733 = vsel %vm731, %v727, 0
        %735 = vmatprep.subr.bf16.mxu0 0
        %736 = vmatpush1.bf16.msra.mxu0 %v733
        %737 = vmatprep.subr.bf16.mxu0 0
        %738 = vmatpush1.bf16.msra.mxu0 0
        %739 = vmatprep.subr.bf16.mxu0 0
        %740 = vmatpush1.bf16.msra.mxu0 0
        %741 = vmatprep.subr.bf16.mxu0 0
        %742 = vmatpush1.bf16.msra.mxu0 0
        %743 = vmatprep.subr.bf16.mxu0 0
        %744 = vmatpush1.bf16.msra.mxu0 0
        %745 = vmatprep.subr.bf16.mxu0 0
        %746 = vmatpush1.bf16.msra.mxu0 0
        %747 = vmatprep.subr.bf16.mxu0 0
        %748 = vmatpush1.bf16.msra.mxu0 0
        %749 = vmatprep.subr.bf16.mxu0 0
        %750 = vmatpush1.bf16.msra.mxu0 0
        %751 = vmatprep.subr.bf16.mxu0 0
        %752 = vmatpush1.bf16.msra.mxu0 0
        %753 = vmatprep.subr.bf16.mxu0 0
        %754 = vmatpush1.bf16.msra.mxu0 0
        %755 = vmatprep.subr.bf16.mxu0 0
        %756 = vmatpush1.bf16.msra.mxu0 0
        %757 = vmatprep.subr.bf16.mxu0 0
        %758 = vmatpush1.bf16.msra.mxu0 0
        %759 = vmatprep.subr.bf16.mxu0 0
        %760 = vmatpush1.bf16.msra.mxu0 0
        %761 = vmatprep.subr.bf16.mxu0 0
        %762 = vmatpush1.bf16.msra.mxu0 0
        %763 = vmatprep.subr.bf16.mxu0 0
        %764 = vmatpush1.bf16.msra.mxu0 0
        %765 = vmatprep.subr.bf16.mxu0 0
        %766 = vmatpush1.bf16.msra.mxu0 0
        %767 = vmatprep.mubr.bf16.mxu0 0
        %768 = vmatmul.mubr.bf16.gmra.mrb[0].mxu0 %v729
        %v769 = vpop.f32.mrb[0].mxu0
        %v770 = vadd.f32 0.0, %v769
        %v771 = vpop.f32.mrb[0].mxu0
        %v772 = vpop.f32.mrb[0].mxu0
        %v773 = vpop.f32.mrb[0].mxu0
        %774 = vdwg.mxu0
        %v775 = vrcp.pop %v724
        %v776 = vmul.f32 %v770, %v775
        %v777 = vpack.c.bf16 %v776, %v776
        %778 = vrot.lane.b32.xlu0 %v665, 120
        %v779 = vpop.permute.xlu0 %778
        %780 = vrot.lane.b32.xlu0 %v665, 88
        %v781 = vpop.permute.xlu0 %780
        %v783 = vsel %vm669, %v779, 0
        %v786 = vsel %vm669, %v781, 0
        %788 = vmatprep.subr.bf16.mxu0 0
        %789 = vmatpush1.bf16.xpose.msra.mxu0 %v786
        %790 = vmatprep.subr.bf16.mxu0 0
        %791 = vmatpush1.bf16.xpose.msra.mxu0 0
        %792 = vmatprep.subr.bf16.mxu0 0
        %793 = vmatpush1.bf16.xpose.msra.mxu0 0
        %794 = vmatprep.subr.bf16.mxu0 0
        %795 = vmatpush1.bf16.xpose.msra.mxu0 0
        %796 = vmatprep.subr.bf16.mxu0 0
        %797 = vmatpush1.bf16.xpose.msra.mxu0 0
        %798 = vmatprep.subr.bf16.mxu0 0
        %799 = vmatpush1.bf16.xpose.msra.mxu0 0
        %800 = vmatprep.subr.bf16.mxu0 0
        %801 = vmatpush1.bf16.xpose.msra.mxu0 0
        %802 = vmatprep.subr.bf16.mxu0 0
        %803 = vmatpush1.bf16.xpose.msra.mxu0 0
        %804 = vmatprep.subr.bf16.mxu0 0
        %805 = vmatpush1.bf16.xpose.msra.mxu0 0
        %806 = vmatprep.subr.bf16.mxu0 0
        %807 = vmatpush1.bf16.xpose.msra.mxu0 0
        %808 = vmatprep.subr.bf16.mxu0 0
        %809 = vmatpush1.bf16.xpose.msra.mxu0 0
        %810 = vmatprep.subr.bf16.mxu0 0
        %811 = vmatpush1.bf16.xpose.msra.mxu0 0
        %812 = vmatprep.subr.bf16.mxu0 0
        %813 = vmatpush1.bf16.xpose.msra.mxu0 0
        %814 = vmatprep.subr.bf16.mxu0 0
        %815 = vmatpush1.bf16.xpose.msra.mxu0 0
        %816 = vmatprep.subr.bf16.mxu0 0
        %817 = vmatpush1.bf16.xpose.msra.mxu0 0
        %818 = vmatprep.subr.bf16.mxu0 0
        %819 = vmatpush1.bf16.xpose.msra.mxu0 0
        %820 = vmatprep.mubr.bf16.mxu0 0
        %821 = vmatmul.mubr.bf16.gmra.mrb[0].mxu0 %v783
        %v822 = vpop.f32.mrb[0].mxu0
        %v823 = vadd.f32 %v566, %v822
        %v824 = vpop.f32.mrb[0].mxu0
        %v825 = vpop.f32.mrb[0].mxu0
        %v826 = vpop.f32.mrb[0].mxu0
        %827 = vdwg.mxu0
        %v828 = vsel %vm669, %v823, -inf
        %829 = vmax.xlane.f32.xlu0 %v828
        %v830 = vpop.xlane.xlu0 %829
        %v831 = vsub.f32 %v823, %v830
        %v832 = vmul.f32 %v831, 1.442695
        %v833 = vpow.pop %v832
        %v834 = vsel %vm669, %v833, 0.0
        %835 = vadd.xlane.f32.xlu0 %v834
        %v836 = vpop.xlane.xlu0 %835
        %v837 = vpack.c.bf16 %v833, %v833
        %838 = vrot.lane.b32.xlu0 %v665, 56
        %v839 = vpop.permute.xlu0 %838
        %v841 = vsel %vm669, %v837, 0
        %v844 = vsel %vm731, %v839, 0
        %846 = vmatprep.subr.bf16.mxu0 0
        %847 = vmatpush1.bf16.msra.mxu0 %v844
        %848 = vmatprep.subr.bf16.mxu0 0
        %849 = vmatpush1.bf16.msra.mxu0 0
        %850 = vmatprep.subr.bf16.mxu0 0
        %851 = vmatpush1.bf16.msra.mxu0 0
        %852 = vmatprep.subr.bf16.mxu0 0
        %853 = vmatpush1.bf16.msra.mxu0 0
        %854 = vmatprep.subr.bf16.mxu0 0
        %855 = vmatpush1.bf16.msra.mxu0 0
        %856 = vmatprep.subr.bf16.mxu0 0
        %857 = vmatpush1.bf16.msra.mxu0 0
        %858 = vmatprep.subr.bf16.mxu0 0
        %859 = vmatpush1.bf16.msra.mxu0 0
        %860 = vmatprep.subr.bf16.mxu0 0
        %861 = vmatpush1.bf16.msra.mxu0 0
        %862 = vmatprep.subr.bf16.mxu0 0
        %863 = vmatpush1.bf16.msra.mxu0 0
        %864 = vmatprep.subr.bf16.mxu0 0
        %865 = vmatpush1.bf16.msra.mxu0 0
        %866 = vmatprep.subr.bf16.mxu0 0
        %867 = vmatpush1.bf16.msra.mxu0 0
        %868 = vmatprep.subr.bf16.mxu0 0
        %869 = vmatpush1.bf16.msra.mxu0 0
        %870 = vmatprep.subr.bf16.mxu0 0
        %871 = vmatpush1.bf16.msra.mxu0 0
        %872 = vmatprep.subr.bf16.mxu0 0
        %873 = vmatpush1.bf16.msra.mxu0 0
        %874 = vmatprep.subr.bf16.mxu0 0
        %875 = vmatpush1.bf16.msra.mxu0 0
        %876 = vmatprep.subr.bf16.mxu0 0
        %877 = vmatpush1.bf16.msra.mxu0 0
        %878 = vmatprep.mubr.bf16.mxu0 0
        %879 = vmatmul.mubr.bf16.gmra.mrb[0].mxu0 %v841
        %v880 = vpop.f32.mrb[0].mxu0
        %v881 = vadd.f32 0.0, %v880
        %v882 = vpop.f32.mrb[0].mxu0
        %v883 = vpop.f32.mrb[0].mxu0
        %v884 = vpop.f32.mrb[0].mxu0
        %885 = vdwg.mxu0
        %v886 = vrcp.pop %v836
        %v887 = vmul.f32 %v881, %v886
        %v888 = vpack.c.bf16 %v887, %v887
        %889 = vrot.lane.b32.xlu0 %v665, 112
        %v890 = vpop.permute.xlu0 %889
        %891 = vrot.lane.b32.xlu0 %v665, 80
        %v892 = vpop.permute.xlu0 %891
        %v894 = vsel %vm669, %v890, 0
        %v897 = vsel %vm669, %v892, 0
        %899 = vmatprep.subr.bf16.mxu0 0
        %900 = vmatpush1.bf16.xpose.msra.mxu0 %v897
        %901 = vmatprep.subr.bf16.mxu0 0
        %902 = vmatpush1.bf16.xpose.msra.mxu0 0
        %903 = vmatprep.subr.bf16.mxu0 0
        %904 = vmatpush1.bf16.xpose.msra.mxu0 0
        %905 = vmatprep.subr.bf16.mxu0 0
        %906 = vmatpush1.bf16.xpose.msra.mxu0 0
        %907 = vmatprep.subr.bf16.mxu0 0
        %908 = vmatpush1.bf16.xpose.msra.mxu0 0
        %909 = vmatprep.subr.bf16.mxu0 0
        %910 = vmatpush1.bf16.xpose.msra.mxu0 0
        %911 = vmatprep.subr.bf16.mxu0 0
        %912 = vmatpush1.bf16.xpose.msra.mxu0 0
        %913 = vmatprep.subr.bf16.mxu0 0
        %914 = vmatpush1.bf16.xpose.msra.mxu0 0
        %915 = vmatprep.subr.bf16.mxu0 0
        %916 = vmatpush1.bf16.xpose.msra.mxu0 0
        %917 = vmatprep.subr.bf16.mxu0 0
        %918 = vmatpush1.bf16.xpose.msra.mxu0 0
        %919 = vmatprep.subr.bf16.mxu0 0
        %920 = vmatpush1.bf16.xpose.msra.mxu0 0
        %921 = vmatprep.subr.bf16.mxu0 0
        %922 = vmatpush1.bf16.xpose.msra.mxu0 0
        %923 = vmatprep.subr.bf16.mxu0 0
        %924 = vmatpush1.bf16.xpose.msra.mxu0 0
        %925 = vmatprep.subr.bf16.mxu0 0
        %926 = vmatpush1.bf16.xpose.msra.mxu0 0
        %927 = vmatprep.subr.bf16.mxu0 0
        %928 = vmatpush1.bf16.xpose.msra.mxu0 0
        %929 = vmatprep.subr.bf16.mxu0 0
        %930 = vmatpush1.bf16.xpose.msra.mxu0 0
        %931 = vmatprep.mubr.bf16.mxu0 0
        %932 = vmatmul.mubr.bf16.gmra.mrb[0].mxu0 %v894
        %v933 = vpop.f32.mrb[0].mxu0
        %v934 = vadd.f32 %v566, %v933
        %v935 = vpop.f32.mrb[0].mxu0
        %v936 = vpop.f32.mrb[0].mxu0
        %v937 = vpop.f32.mrb[0].mxu0
        %938 = vdwg.mxu0
        %v939 = vsel %vm669, %v934, -inf
        %940 = vmax.xlane.f32.xlu0 %v939
        %v941 = vpop.xlane.xlu0 %940
        %v942 = vsub.f32 %v934, %v941
        %v943 = vmul.f32 %v942, 1.442695
        %v944 = vpow.pop %v943
        %v945 = vsel %vm669, %v944, 0.0
        %946 = vadd.xlane.f32.xlu0 %v945
        %v947 = vpop.xlane.xlu0 %946
        %v948 = vpack.c.bf16 %v944, %v944
        %949 = vrot.lane.b32.xlu0 %v665, 48
        %v950 = vpop.permute.xlu0 %949
        %v952 = vsel %vm669, %v948, 0
        %v955 = vsel %vm731, %v950, 0
        %957 = vmatprep.subr.bf16.mxu0 0
        %958 = vmatpush1.bf16.msra.mxu0 %v955
        %959 = vmatprep.subr.bf16.mxu0 0
        %960 = vmatpush1.bf16.msra.mxu0 0
        %961 = vmatprep.subr.bf16.mxu0 0
        %962 = vmatpush1.bf16.msra.mxu0 0
        %963 = vmatprep.subr.bf16.mxu0 0
        %964 = vmatpush1.bf16.msra.mxu0 0
        %965 = vmatprep.subr.bf16.mxu0 0
        %966 = vmatpush1.bf16.msra.mxu0 0
        %967 = vmatprep.subr.bf16.mxu0 0
        %968 = vmatpush1.bf16.msra.mxu0 0
        %969 = vmatprep.subr.bf16.mxu0 0
        %970 = vmatpush1.bf16.msra.mxu0 0
        %971 = vmatprep.subr.bf16.mxu0 0
        %972 = vmatpush1.bf16.msra.mxu0 0
        %973 = vmatprep.subr.bf16.mxu0 0
        %974 = vmatpush1.bf16.msra.mxu0 0
        %975 = vmatprep.subr.bf16.mxu0 0
        %976 = vmatpush1.bf16.msra.mxu0 0
        %977 = vmatprep.subr.bf16.mxu0 0
        %978 = vmatpush1.bf16.msra.mxu0 0
        %979 = vmatprep.subr.bf16.mxu0 0
        %980 = vmatpush1.bf16.msra.mxu0 0
        %981 = vmatprep.subr.bf16.mxu0 0
        %982 = vmatpush1.bf16.msra.mxu0 0
        %983 = vmatprep.subr.bf16.mxu0 0
        %984 = vmatpush1.bf16.msra.mxu0 0
        %985 = vmatprep.subr.bf16.mxu0 0
        %986 = vmatpush1.bf16.msra.mxu0 0
        %987 = vmatprep.subr.bf16.mxu0 0
        %988 = vmatpush1.bf16.msra.mxu0 0
        %989 = vmatprep.mubr.bf16.mxu0 0
        %990 = vmatmul.mubr.bf16.gmra.mrb[0].mxu0 %v952
        %v991 = vpop.f32.mrb[0].mxu0
        %v992 = vadd.f32 0.0, %v991
        %v993 = vpop.f32.mrb[0].mxu0
        %v994 = vpop.f32.mrb[0].mxu0
        %v995 = vpop.f32.mrb[0].mxu0
        %996 = vdwg.mxu0
        %v997 = vrcp.pop %v947
        %v998 = vmul.f32 %v992, %v997
        %v999 = vpack.c.bf16 %v998, %v998
        %1000 = vrot.lane.b32.xlu0 %v665, 104
        %v1001 = vpop.permute.xlu0 %1000
        %1002 = vrot.lane.b32.xlu0 %v665, 72
        %v1003 = vpop.permute.xlu0 %1002
        %v1005 = vsel %vm669, %v1001, 0
        %v1008 = vsel %vm669, %v1003, 0
        %1010 = vmatprep.subr.bf16.mxu0 0
        %1011 = vmatpush1.bf16.xpose.msra.mxu0 %v1008
        %1012 = vmatprep.subr.bf16.mxu0 0
        %1013 = vmatpush1.bf16.xpose.msra.mxu0 0
        %1014 = vmatprep.subr.bf16.mxu0 0
        %1015 = vmatpush1.bf16.xpose.msra.mxu0 0
        %1016 = vmatprep.subr.bf16.mxu0 0
        %1017 = vmatpush1.bf16.xpose.msra.mxu0 0
        %1018 = vmatprep.subr.bf16.mxu0 0
        %1019 = vmatpush1.bf16.xpose.msra.mxu0 0
        %1020 = vmatprep.subr.bf16.mxu0 0
        %1021 = vmatpush1.bf16.xpose.msra.mxu0 0
        %1022 = vmatprep.subr.bf16.mxu0 0
        %1023 = vmatpush1.bf16.xpose.msra.mxu0 0
        %1024 = vmatprep.subr.bf16.mxu0 0
        %1025 = vmatpush1.bf16.xpose.msra.mxu0 0
        %1026 = vmatprep.subr.bf16.mxu0 0
        %1027 = vmatpush1.bf16.xpose.msra.mxu0 0
        %1028 = vmatprep.subr.bf16.mxu0 0
        %1029 = vmatpush1.bf16.xpose.msra.mxu0 0
        %1030 = vmatprep.subr.bf16.mxu0 0
        %1031 = vmatpush1.bf16.xpose.msra.mxu0 0
        %1032 = vmatprep.subr.bf16.mxu0 0
        %1033 = vmatpush1.bf16.xpose.msra.mxu0 0
        %1034 = vmatprep.subr.bf16.mxu0 0
        %1035 = vmatpush1.bf16.xpose.msra.mxu0 0
        %1036 = vmatprep.subr.bf16.mxu0 0
        %1037 = vmatpush1.bf16.xpose.msra.mxu0 0
        %1038 = vmatprep.subr.bf16.mxu0 0
        %1039 = vmatpush1.bf16.xpose.msra.mxu0 0
        %1040 = vmatprep.subr.bf16.mxu0 0
        %1041 = vmatpush1.bf16.xpose.msra.mxu0 0
        %1042 = vmatprep.mubr.bf16.mxu0 0
        %1043 = vmatmul.mubr.bf16.gmra.mrb[0].mxu0 %v1005
        %v1044 = vpop.f32.mrb[0].mxu0
        %v1045 = vadd.f32 %v566, %v1044
        %v1046 = vpop.f32.mrb[0].mxu0
        %v1047 = vpop.f32.mrb[0].mxu0
        %v1048 = vpop.f32.mrb[0].mxu0
        %1049 = vdwg.mxu0
        %v1050 = vsel %vm669, %v1045, -inf
        %1051 = vmax.xlane.f32.xlu0 %v1050
        %v1052 = vpop.xlane.xlu0 %1051
        %v1053 = vsub.f32 %v1045, %v1052
        %v1054 = vmul.f32 %v1053, 1.442695
        %v1055 = vpow.pop %v1054
        %v1056 = vsel %vm669, %v1055, 0.0
        %1057 = vadd.xlane.f32.xlu0 %v1056
        %v1058 = vpop.xlane.xlu0 %1057
        %v1059 = vpack.c.bf16 %v1055, %v1055
        %1060 = vrot.lane.b32.xlu0 %v665, 40
        %v1061 = vpop.permute.xlu0 %1060
        %v1063 = vsel %vm669, %v1059, 0
        %v1066 = vsel %vm731, %v1061, 0
        %1068 = vmatprep.subr.bf16.mxu0 0
        %1069 = vmatpush1.bf16.msra.mxu0 %v1066
        %1070 = vmatprep.subr.bf16.mxu0 0
        %1071 = vmatpush1.bf16.msra.mxu0 0
        %1072 = vmatprep.subr.bf16.mxu0 0
        %1073 = vmatpush1.bf16.msra.mxu0 0
        %1074 = vmatprep.subr.bf16.mxu0 0
        %1075 = vmatpush1.bf16.msra.mxu0 0
        %1076 = vmatprep.subr.bf16.mxu0 0
        %1077 = vmatpush1.bf16.msra.mxu0 0
        %1078 = vmatprep.subr.bf16.mxu0 0
        %1079 = vmatpush1.bf16.msra.mxu0 0
        %1080 = vmatprep.subr.bf16.mxu0 0
        %1081 = vmatpush1.bf16.msra.mxu0 0
        %1082 = vmatprep.subr.bf16.mxu0 0
        %1083 = vmatpush1.bf16.msra.mxu0 0
        %1084 = vmatprep.subr.bf16.mxu0 0
        %1085 = vmatpush1.bf16.msra.mxu0 0
        %1086 = vmatprep.subr.bf16.mxu0 0
        %1087 = vmatpush1.bf16.msra.mxu0 0
        %1088 = vmatprep.subr.bf16.mxu0 0
        %1089 = vmatpush1.bf16.msra.mxu0 0
        %1090 = vmatprep.subr.bf16.mxu0 0
        %1091 = vmatpush1.bf16.msra.mxu0 0
        %1092 = vmatprep.subr.bf16.mxu0 0
        %1093 = vmatpush1.bf16.msra.mxu0 0
        %1094 = vmatprep.subr.bf16.mxu0 0
        %1095 = vmatpush1.bf16.msra.mxu0 0
        %1096 = vmatprep.subr.bf16.mxu0 0
        %1097 = vmatpush1.bf16.msra.mxu0 0
        %1098 = vmatprep.subr.bf16.mxu0 0
        %1099 = vmatpush1.bf16.msra.mxu0 0
        %1100 = vmatprep.mubr.bf16.mxu0 0
        %1101 = vmatmul.mubr.bf16.gmra.mrb[0].mxu0 %v1063
        %v1102 = vpop.f32.mrb[0].mxu0
        %v1103 = vadd.f32 0.0, %v1102
        %v1104 = vpop.f32.mrb[0].mxu0
        %v1105 = vpop.f32.mrb[0].mxu0
        %v1106 = vpop.f32.mrb[0].mxu0
        %1107 = vdwg.mxu0
        %v1108 = vrcp.pop %v1058
        %v1109 = vmul.f32 %v1103, %v1108
        %v1110 = vpack.c.bf16 %v1109, %v1109
        %1112 = vrot.lane.b32.xlu0 %v888, 8
        %v1113 = vpop.permute.xlu0 %1112
        %1115 = vrot.lane.b32.xlu0 %v999, 16
        %v1116 = vpop.permute.xlu0 %1115
        %1118 = vrot.lane.b32.xlu0 %v1110, 24
        %v1119 = vpop.permute.xlu0 %1118
        %v1122 = vsel %vm669, %v777, %v1113
        %vm1123 = vcmask 130048
        %v1125 = vsel %vm1123, %v1122, %v1116
        %vm1126 = vcmask 195584
        %v1128 = vsel %vm1126, %v1125, %v1119
        %v1129 = vld [vmem:[#allocation3] sm:$0xf]
        %v1130 = vld [vmem:[#allocation3 + $0x4] sm:$0xf]
        %v1131 = vld [vmem:[#allocation3 + $0x8] sm:$0xf]
        %v1132 = vld [vmem:[#allocation3 + $0xc] sm:$0xf]
        %v1133 = vld [vmem:[%s5] sm:$0x1]
        %v1135 = vlaneseq
        %v1136 = vshrl.u32 %v1135, 7
        %v1137 = vsub.s32 0, %v1136
        %v1138 = vrot.slane %v1133, %v1137
        %v1144 = vunpack.c.l.b16 %v1129
        %v1145 = vunpack.c.l.b16 %v1130
        %v1146 = vunpack.c.l.b16 %v1131
        %v1147 = vunpack.c.l.b16 %v1132
        %v1148 = vpack.c.b16 %v1145, %v1144
        %v1149 = vpack.c.b16 %v1147, %v1146
        %v1152 = vsel %vm569, %v1128, 0
        %1154 = vmatprep.subr.bf16.mxu0 0
        %1155 = vmatpush1.bf16.msra.mxu0 %v1148
        %1156 = vmatprep.subr.bf16.mxu0 0
        %1157 = vmatpush1.bf16.msra.mxu0 %v1149
        %1158 = vmatprep.subr.bf16.mxu0 0
        %1159 = vmatpush1.bf16.msra.mxu0 0
        %1160 = vmatprep.subr.bf16.mxu0 0
        %1161 = vmatpush1.bf16.msra.mxu0 0
        %1162 = vmatprep.subr.bf16.mxu0 0
        %1163 = vmatpush1.bf16.msra.mxu0 0
        %1164 = vmatprep.subr.bf16.mxu0 0
        %1165 = vmatpush1.bf16.msra.mxu0 0
        %1166 = vmatprep.subr.bf16.mxu0 0
        %1167 = vmatpush1.bf16.msra.mxu0 0
        %1168 = vmatprep.subr.bf16.mxu0 0
        %1169 = vmatpush1.bf16.msra.mxu0 0
        %1170 = vmatprep.subr.bf16.mxu0 0
        %1171 = vmatpush1.bf16.msra.mxu0 0
        %1172 = vmatprep.subr.bf16.mxu0 0
        %1173 = vmatpush1.bf16.msra.mxu0 0
        %1174 = vmatprep.subr.bf16.mxu0 0
        %1175 = vmatpush1.bf16.msra.mxu0 0
        %1176 = vmatprep.subr.bf16.mxu0 0
        %1177 = vmatpush1.bf16.msra.mxu0 0
        %1178 = vmatprep.subr.bf16.mxu0 0
        %1179 = vmatpush1.bf16.msra.mxu0 0
        %1180 = vmatprep.subr.bf16.mxu0 0
        %1181 = vmatpush1.bf16.msra.mxu0 0
        %1182 = vmatprep.subr.bf16.mxu0 0
        %1183 = vmatpush1.bf16.msra.mxu0 0
        %1184 = vmatprep.subr.bf16.mxu0 0
        %1185 = vmatpush1.bf16.msra.mxu0 0
        %1186 = vmatprep.mubr.bf16.mxu0 0
        %1187 = vmatmul.mubr.bf16.gmra.mrb[0].mxu0 %v1152
        %v1188 = vpop.f32.mrb[0].mxu0
        %v1189 = vadd.f32 %v1138, %v1188
        %v1190 = vpop.f32.mrb[0].mxu0
        %v1191 = vpop.f32.mrb[0].mxu0
        %v1192 = vpop.f32.mrb[0].mxu0
        %1193 = vdwg.mxu0
        %v1194 = vadd.f32 %v565, %v1189
        %v1195 = vld [vmem:[#allocation9] sm:$0x1]
        %v1196 = vld [vmem:[#allocation11] sm:$0x1]
        %v1197 = vsel %vm569, %v1194, 0.0
        %1198 = vadd.xlane.f32.xlu0 %v1197
        %v1199 = vpop.xlane.xlu0 %1198
        %v1200 = vmul.f32 %v1199, %v573
        %v1201 = vsub.f32 %v1194, %v1200
        %v1202 = vmul.f32 %v1201, %v1201
        %v1203 = vsel %vm569, %v1202, 0.0
        %1204 = vadd.xlane.f32.xlu0 %v1203
        %v1205 = vpop.xlane.xlu0 %1204
        %v1206 = vmul.f32 %v1205, %v573
        %v1207 = vadd.f32 %v1206, 1e-05
        %v1208 = vrsqrt.pop %v1207
        %v1209 = vmul.f32 %v1201, %v1208
        %v1211 = vlaneseq
        %v1212 = vshrl.u32 %v1211, 7
        %v1213 = vsub.s32 0, %v1212
        %v1214 = vrot.slane %v1195, %v1213
        %v1216 = vmul.f32 %v1209, %v1214
        %v1218 = vlaneseq
        %v1219 = vshrl.u32 %v1218, 7
        %v1220 = vsub.s32 0, %v1219
        %v1221 = vrot.slane %v1196, %v1220
        %v1223 = vadd.f32 %v1216, %v1221
        %v1224 = vpack.c.bf16 %v1223, %v1223
        %v1225 = vld [vmem:[%s10] sm:$0xf]
        %v1226 = vld [vmem:[%s10 + $0x4] sm:$0xf]
        %v1227 = vld [vmem:[%s10 + $0x8] sm:$0xf]
        %v1228 = vld [vmem:[%s10 + $0xc] sm:$0xf]
        %v1229 = vld [vmem:[%s11] sm:$0x1]
        %v1231 = vlaneseq
        %v1232 = vshrl.u32 %v1231, 7
        %v1233 = vsub.s32 0, %v1232
        %v1234 = vrot.slane %v1229, %v1233
        %v1240 = vunpack.c.l.b16 %v1225
        %v1241 = vunpack.c.l.b16 %v1226
        %v1242 = vunpack.c.l.b16 %v1227
        %v1243 = vunpack.c.l.b16 %v1228
        %v1244 = vpack.c.b16 %v1241, %v1240
        %v1245 = vpack.c.b16 %v1243, %v1242
        %v1249 = vsel %vm569, %v1224, 0
        %1251 = vmatprep.subr.bf16.mxu0 0
        %1252 = vmatpush1.bf16.msra.mxu0 %v1244
        %1253 = vmatprep.subr.bf16.mxu0 0
        %1254 = vmatpush1.bf16.msra.mxu0 %v1245
        %1255 = vmatprep.subr.bf16.mxu0 0
        %1256 = vmatpush1.bf16.msra.mxu0 0
        %1257 = vmatprep.subr.bf16.mxu0 0
        %1258 = vmatpush1.bf16.msra.mxu0 0
        %1259 = vmatprep.subr.bf16.mxu0 0
        %1260 = vmatpush1.bf16.msra.mxu0 0
        %1261 = vmatprep.subr.bf16.mxu0 0
        %1262 = vmatpush1.bf16.msra.mxu0 0
        %1263 = vmatprep.subr.bf16.mxu0 0
        %1264 = vmatpush1.bf16.msra.mxu0 0
        %1265 = vmatprep.subr.bf16.mxu0 0
        %1266 = vmatpush1.bf16.msra.mxu0 0
        %1267 = vmatprep.subr.bf16.mxu0 0
        %1268 = vmatpush1.bf16.msra.mxu0 0
        %1269 = vmatprep.subr.bf16.mxu0 0
        %1270 = vmatpush1.bf16.msra.mxu0 0
        %1271 = vmatprep.subr.bf16.mxu0 0
        %1272 = vmatpush1.bf16.msra.mxu0 0
        %1273 = vmatprep.subr.bf16.mxu0 0
        %1274 = vmatpush1.bf16.msra.mxu0 0
        %1275 = vmatprep.subr.bf16.mxu0 0
        %1276 = vmatpush1.bf16.msra.mxu0 0
        %1277 = vmatprep.subr.bf16.mxu0 0
        %1278 = vmatpush1.bf16.msra.mxu0 0
        %1279 = vmatprep.subr.bf16.mxu0 0
        %1280 = vmatpush1.bf16.msra.mxu0 0
        %1281 = vmatprep.subr.bf16.mxu0 0
        %1282 = vmatpush1.bf16.msra.mxu0 0
        %1283 = vmatprep.mubr.bf16.mxu0 0
        %1284 = vmatmul.mubr.bf16.gmra.mrb[0].mxu0 %v1249
        %v1285 = vpop.f32.mrb[0].mxu0
        %v1286 = vadd.f32 %v1234, %v1285
        %v1287 = vpop.f32.mrb[0].mxu0
        %v1288 = vpop.f32.mrb[0].mxu0
        %v1289 = vpop.f32.mrb[0].mxu0
        %1290 = vdwg.mxu0
        %v1291 = vmul.f32 %v1286, 0.5
        %v1292 = vmul.f32 %v1286, 0.044715
        %v1293 = vmul.f32 %v1292, %v1286
        %v1294 = vmul.f32 %v1293, %v1286
        %v1295 = vadd.f32 %v1286, %v1294
        %v1296 = vmul.f32 %v1295, 0.7978846
        %v1297 = vtanh.pop %v1296
        %v1298 = vadd.f32 %v1297, 1.0
        %v1299 = vmul.f32 %v1291, %v1298
        %v1300 = vpack.c.bf16 %v1299, %v1299
        %v1301 = vld [vmem:[%s12] sm:$0xf]
        %v1302 = vld [vmem:[%s12 + $0x4] sm:$0xf]
        %v1303 = vld [vmem:[%s12 + $0x8] sm:$0xf]
        %v1304 = vld [vmem:[%s12 + $0xc] sm:$0xf]
        %v1305 = vld [vmem:[%s12 + $0x10] sm:$0xf]
        %v1306 = vld [vmem:[%s12 + $0x14] sm:$0xf]
        %v1307 = vld [vmem:[%s12 + $0x18] sm:$0xf]
        %v1308 = vld [vmem:[%s12 + $0x1c] sm:$0xf]
        %v1309 = vld [vmem:[%s13] sm:$0x1]
        %v1311 = vlaneseq
        %v1312 = vshrl.u32 %v1311, 7
        %v1313 = vsub.s32 0, %v1312
        %v1314 = vrot.slane %v1309, %v1313
        %v1324 = vunpack.c.l.b16 %v1301
        %v1325 = vunpack.c.l.b16 %v1302
        %v1326 = vunpack.c.l.b16 %v1303
        %v1327 = vunpack.c.l.b16 %v1304
        %v1328 = vunpack.c.l.b16 %v1305
        %v1329 = vunpack.c.l.b16 %v1306
        %v1330 = vunpack.c.l.b16 %v1307
        %v1331 = vunpack.c.l.b16 %v1308
        %v1332 = vpack.c.b16 %v1325, %v1324
        %v1333 = vpack.c.b16 %v1327, %v1326
        %v1334 = vpack.c.b16 %v1329, %v1328
        %v1335 = vpack.c.b16 %v1331, %v1330
        %vm1340 = vcmask 523264
        %v1342 = vsel %vm1340, %v1300, 0
        %1344 = vmatprep.subr.bf16.mxu0 0
        %1345 = vmatpush1.bf16.msra.mxu0 %v1332
        %1346 = vmatprep.subr.bf16.mxu0 0
        %1347 = vmatpush1.bf16.msra.mxu0 %v1333
        %1348 = vmatprep.subr.bf16.mxu0 0
        %1349 = vmatpush1.bf16.msra.mxu0 %v1334
        %1350 = vmatprep.subr.bf16.mxu0 0
        %1351 = vmatpush1.bf16.msra.mxu0 %v1335
        %1352 = vmatprep.subr.bf16.mxu0 0
        %1353 = vmatpush1.bf16.msra.mxu0 0
        %1354 = vmatprep.subr.bf16.mxu0 0
        %1355 = vmatpush1.bf16.msra.mxu0 0
        %1356 = vmatprep.subr.bf16.mxu0 0
        %1357 = vmatpush1.bf16.msra.mxu0 0
        %1358 = vmatprep.subr.bf16.mxu0 0
        %1359 = vmatpush1.bf16.msra.mxu0 0
        %1360 = vmatprep.subr.bf16.mxu0 0
        %1361 = vmatpush1.bf16.msra.mxu0 0
        %1362 = vmatprep.subr.bf16.mxu0 0
        %1363 = vmatpush1.bf16.msra.mxu0 0
        %1364 = vmatprep.subr.bf16.mxu0 0
        %1365 = vmatpush1.bf16.msra.mxu0 0
        %1366 = vmatprep.subr.bf16.mxu0 0
        %1367 = vmatpush1.bf16.msra.mxu0 0
        %1368 = vmatprep.subr.bf16.mxu0 0
        %1369 = vmatpush1.bf16.msra.mxu0 0
        %1370 = vmatprep.subr.bf16.mxu0 0
        %1371 = vmatpush1.bf16.msra.mxu0 0
        %1372 = vmatprep.subr.bf16.mxu0 0
        %1373 = vmatpush1.bf16.msra.mxu0 0
        %1374 = vmatprep.subr.bf16.mxu0 0
        %1375 = vmatpush1.bf16.msra.mxu0 0
        %1376 = vmatprep.mubr.bf16.mxu0 0
        %1377 = vmatmul.mubr.bf16.gmra.mrb[0].mxu0 %v1342
        %v1378 = vpop.f32.mrb[0].mxu0
        %v1379 = vadd.f32 %v1314, %v1378
        %v1380 = vpop.f32.mrb[0].mxu0
        %v1381 = vpop.f32.mrb[0].mxu0
        %v1382 = vpop.f32.mrb[0].mxu0
        %1383 = vdwg.mxu0
        %v1384 = vadd.f32 %v1194, %v1379
        %1385 = vst.msk [vmem:[#allocation2] sm:$0xff] %vm569, %v1384
        %p1386 = scmp.eq.s32.totalorder %s36, 1
        // Predicated region
        $region101: #{tpu_custom_call.1} parent=75 // pred_check
          %p1387 = pneg %p1386
        $region102: #{tpu_custom_call.1} parent=75 // pred_check_branch
          %1389 = sbr.rel (%p1387) target = $region104
        $region103: #{tpu_custom_call.1} parent=75 // pred_region
          %1390 = vst.msk [vmem:[%s548] sm:$0xff] %vm569, %v1384
        $region104: #{tpu_custom_call.1} parent=75 // pred_fallthru
          _
        %s1391 = sand.u32 %s355, 1
        %s1392 = scalar_lea.sflag [#allocation5], %s1391
        %s1393 = sand.u32 %s355, 1
        %s1394 = smul.addr %s1393, 8
        %s1395 = scalar_lea.vmem [#allocation12], %s1394
        // Predicated region
        $region105: #{tpu_custom_call.1} parent=75 // pred_check
          %p1396 = pneg %p365
        $region106: #{tpu_custom_call.1} parent=75 // pred_check_branch
          %1398 = sbr.rel (%p1396) target = $region108
        $region107: #{tpu_custom_call.1} parent=75 // pred_region
          %s1400 = ssub.s32 128, 128
          %1401 = vsyncadd %s1392, %s1400
          %s1402 = smul.addr %s35, 128
          %s1403 = scalar_lea.hbm %s14, %s1402
          %s1405 = sshll.u32 %s1395, 4
          %s1406 = int_to_ptr.vmem [resolvable:$true] %s1405
          %1408 = dma.vmem_to_hbm [thread:$0]  %s1406, 128, %s1403, %s1392
        $region108: #{tpu_custom_call.1} parent=75 // pred_fallthru
          _
      $region76: #{tpu_custom_call.1} parent=5 // pred_fallthru
        _
      %p1409 = scmp.le.s32.totalorder 2, %s26
      // Predicated region
      $region109: #{tpu_custom_call.1} parent=5 // pred_check
        %p1410 = pneg %p1409
      $region110: #{tpu_custom_call.1} parent=5 // pred_check_branch
        %1412 = sbr.rel (%p1410) target = $region112
      $region111: #{tpu_custom_call.1} parent=5 // pred_region
        %s1413 = ssub.s32 %s26, 2
        // Predicated region
        $region113: #{tpu_custom_call.1} parent=111 // pred_check
          %p1414 = pneg %p371
        $region114: #{tpu_custom_call.1} parent=111 // pred_check_branch
          %1416 = sbr.rel (%p1414) target = $region116
        $region115: #{tpu_custom_call.1} parent=111 // pred_region
          %s1417 = sand.u32 %s356, 1
          %s1418 = scalar_lea.sflag [#allocation5], %s1417
          %s1419 = sand.u32 %s356, 1
          %s1420 = smul.addr %s1419, 8
          %s1421 = scalar_lea.vmem [#allocation12], %s1420
          %1422 = dma.done %s1418, 128
        $region116: #{tpu_custom_call.1} parent=111 // pred_fallthru
          _
      $region112: #{tpu_custom_call.1} parent=5 // pred_fallthru
        _
    $region6: #{tpu_custom_call.1} parent=1 // loop_footer
      %s30 = sadd.s32 1, %s26
    $region7: #{tpu_custom_call.1} parent=1 // loop_footer_branch
      %25 = sbr.rel target = $region3
    $region8: #{tpu_custom_call.1} parent=1 // loop_exit
      _
    %1423 = vsyncpa [#allocation4], 1
    %s1424 = scalar_lea.sflag [#allocation4], 1
    %1425 = vsyncpa %s1424, 1
    %1426 = vsyncpa [#allocation7], 1
    %1427 = vsyncpa [#allocation10], 1
    %1428 = vsyncpa [#allocation5], 1
    %s1429 = scalar_lea.sflag [#allocation5], 1
    %1430 = vsyncpa %s1429, 1

</llo_original>
